<compile_context>
chip_gen: v7x
topology: tpu7x:2x2x1
jax: 0.10.0
libtpu: 0.0.40
codegen_flags: <defaults>
</compile_context>

<pallas_src>
import functools

import jax
import jax.numpy as jnp
from jax.experimental import pallas as pl
from jax.experimental.pallas import tpu as pltpu


def _quant_kernel(evp_ref, w1t_ref, b1c_ref, w2t_ref, b2c_ref, w3c_ref, b3_ref,
                  out_ref, *, num_bins, hw, inv_gap):
    # evp_ref : (8, C)  rows [ts, pol, x/W, y/H, flat_idx, 0, 0, 0]
    # w2t_ref : (40, 40) bf16 (cast once in the wrapper)
    # out_ref : (num_bins, H*W) accumulator, resident across the chunk axis

    @pl.when(pl.program_id(1) == 0)
    def _init():
        out_ref[...] = jnp.zeros_like(out_ref)

    evp = evp_ref[...]                                  # (8, C)
    ev = evp[0:4, :]                                    # (4, C) MLP input (bin 0)
    ts = evp[0:1, :]                                    # (1, C)
    flat_f = evp[4:5, :]                                # (1, C) flattened pixel index
    c = ev.shape[1]

    w1t = w1t_ref[...]                                  # (40, 4)  f32
    b1c = b1c_ref[...]                                  # (40, 1)  f32
    b2c = b2c_ref[...]                                  # (40, 1)  f32
    w3c = w3c_ref[...]                                  # (40, 1)  f32
    b3 = b3_ref[0]                                      # scalar (SMEM)

    # ---- bin-invariant work, once per chunk ----
    base = jnp.dot(w1t, ev, preferred_element_type=jnp.float32) + b1c  # (40, C)
    w1_ts_col = w1t[:, 0:1]                             # (40, 1): W1 column for ts

    # ---- per-bin first layer, fused second layer (one big MXU streaming dot) ----
    h1_parts = []
    for b in range(num_bins):
        pre = base if b == 0 else base - (b * inv_gap) * w1_ts_col     # (40, C)
        h1 = jnp.maximum(pre, 0.1 * pre)                               # leaky ReLU
        h1_parts.append(h1.astype(jnp.bfloat16))
    h1_all = jnp.concatenate(h1_parts, axis=1)          # (40, nb*C) bf16

    h2_all = jnp.dot(w2t_ref[...], h1_all,
                     preferred_element_type=jnp.float32) + b2c         # (40, nb*C) f32
    h2_all = jnp.maximum(h2_all, 0.1 * h2_all)

    # Final Linear(40,1) as VPU multiply + sublane reduce, per lane-slice of bins.
    rows = []
    for b in range(num_bins):
        h2b = h2_all[:, b * c:(b + 1) * c]                             # (40, C)
        o = jnp.sum(h2b * w3c, axis=0, keepdims=True) + b3             # (1, C)
        rows.append(ts * o)
    vals = jnp.concatenate(rows, axis=0)                # (nb, C) f32

    # ---- scatter-add for all bins: (nb, C) x (HW, C)^T -> (nb, HW) ----
    # Built right before the dot to keep the (HW, C) buffer's live range short;
    # int32 compare is exact for any realistic resolution.
    hw_ids = jax.lax.broadcasted_iota(jnp.int32, (hw, c), 0)
    onehot = (hw_ids == flat_f.astype(jnp.int32)).astype(jnp.float32)  # (HW, C)
    out_ref[...] += jax.lax.dot_general(
        vals, onehot, (((1,), (1,)), ((), ())),
        preferred_element_type=jnp.float32)


def quantization_layer(events, params, *, num_bins, height, width,
                       chunk=4096, num_cores=2):
    """events: (N, 4) float32 rows [t, x, y, p]. Returns (1, num_bins, H, W)."""
    w1, b1, w2, b2, w3, b3 = params
    n = events.shape[0]
    hw = height * width

    if n == 0:
        return jnp.zeros((1, num_bins, height, width), jnp.float32)

    # --- preprocessing (cheap glue, plain JAX; fuses into XLA) ---
    first = events[0, 0]
    last = events[-1, 0]
    dt = last - first
    dt = jnp.where(dt == 0, jnp.float32(1.0), dt)
    ts = (events[:, 0] - first) / dt
    xs = jnp.trunc(events[:, 1])                        # torch .long() truncation
    ys = jnp.trunc(events[:, 2])
    pol = jnp.where(events[:, 3] == 0, jnp.float32(-1.0), events[:, 3])
    flat = xs + width * ys
    zeros = jnp.zeros_like(ts)

    # Single (8, N) packed input: exactly one f32 (8,128) tile per 128 events.
    evp = jnp.stack([ts, pol, xs / width, ys / height, flat,
                     zeros, zeros, zeros], axis=0).astype(jnp.float32)

    # Chunk the event axis (lane axis); pad with zero events (ts=0 -> values=0,
    # flat_idx=0 -> contributes exactly 0, matching the reference).
    chunk = max(128, (int(chunk) // 128) * 128)
    num_cores = max(1, int(num_cores))
    n_chunks = -(-n // chunk)
    n_chunks = -(-n_chunks // num_cores) * num_cores    # multiple of num_cores
    cpc = n_chunks // num_cores                         # chunks per core
    n_pad = n_chunks * chunk
    if n_pad != n:
        evp = jnp.pad(evp, ((0, 0), (0, n_pad - n)))

    # Transposed weights so the event dim stays on lanes inside the kernel.
    w1t = w1.T                                          # (40, 4)  f32
    b1c = b1.T                                          # (40, 1)  f32
    w2t = w2.T.astype(jnp.bfloat16)                     # (40, 40) bf16 (MXU-native)
    b2c = b2.T                                          # (40, 1)  f32
    w3c = w3                                            # (40, 1)  f32
    b3s = b3.reshape(1)                                 # (1,) -> SMEM scalar

    inv_gap = 1.0 / max(num_bins - 1, 1)                # guard num_bins == 1
    kernel = functools.partial(_quant_kernel, num_bins=num_bins, hw=hw,
                               inv_gap=inv_gap)

    full = lambda core, c: (0, 0)
    partials = pl.pallas_call(
        kernel,
        out_shape=jax.ShapeDtypeStruct((num_cores, num_bins, hw), jnp.float32),
        grid_spec=pltpu.PrefetchScalarGridSpec(
            num_scalar_prefetch=0,
            grid=(num_cores, cpc),
            in_specs=[
                pl.BlockSpec((8, chunk),
                             lambda core, c: (0, core * cpc + c)),  # packed events
                pl.BlockSpec((40, 4), full),                        # W1^T
                pl.BlockSpec((40, 1), full),                        # b1^T
                pl.BlockSpec((40, 40), full),                       # W2^T (bf16)
                pl.BlockSpec((40, 1), full),                        # b2^T
                pl.BlockSpec((40, 1), full),                        # W3
                pl.BlockSpec(memory_space=pltpu.MemorySpace.SMEM),  # b3 scalar
            ],
            out_specs=pl.BlockSpec((None, num_bins, hw),
                                   lambda core, c: (core, 0, 0)),
            scratch_shapes=[],
        ),
        compiler_params=pltpu.CompilerParams(
            dimension_semantics=("parallel", "arbitrary"),
            vmem_limit_bytes=32 * 1024 * 1024),
    )(evp, w1t, b1c, w2t, b2c, w3c, b3s)

    out_flat = partials.sum(axis=0)                     # (num_bins, H*W)
    return out_flat.reshape(1, num_bins, height, width)


def _reference(events, params, *, num_bins, height, width):
    """Pure-JAX mirror of the PyTorch forward (for verification)."""
    w1, b1, w2, b2, w3, b3 = params
    first, last = events[0, 0], events[-1, 0]
    dt = jnp.where(last - first == 0, 1.0, last - first)
    ts = (events[:, 0] - first) / dt
    xs = jnp.trunc(events[:, 1])
    ys = jnp.trunc(events[:, 2])
    pol = jnp.where(events[:, 3] == 0, -1.0, events[:, 3])
    idx_before = xs.astype(jnp.int32) + width * ys.astype(jnp.int32)
    vox = jnp.zeros((num_bins * height * width,), jnp.float32)
    leaky = lambda x: jnp.where(x > 0, x, 0.1 * x)
    denom = max(num_bins - 1, 1)
    for b in range(num_bins):
        inp = jnp.stack([ts - b / denom, pol, xs / width, ys / height], axis=1)
        h = leaky(inp @ w1 + b1[0])
        h = leaky(h @ w2 + b2[0])
        o = h @ w3 + b3[0]
        values = ts * o[:, 0]
        idx = idx_before + width * height * b
        vox = vox.at[idx].add(values)
    return vox.reshape(1, num_bins, height, width)


def _init_params(key):
    # nn.Linear default init: U(-1/sqrt(fan_in), 1/sqrt(fan_in)); deterministic here.
    dims = [(4, 40), (40, 40), (40, 1)]
    params = []
    for (fi, fo) in dims:
        key, kw, kb = jax.random.split(key, 3)
        bound = 1.0 / jnp.sqrt(fi)
        w = jax.random.uniform(kw, (fi, fo), jnp.float32, -bound, bound)
        b = jax.random.uniform(kb, (1, fo), jnp.float32, -bound, bound)
        params += [w, b]
    return tuple(params)


if __name__ == "__main__":
    NUM_BINS, HEIGHT, WIDTH = 5, 16, 16
    N_EVENTS = 300   # small correctness config; chunk=128 -> 4 chunks, 2 per core
                     # (exercises chunk accumulation AND the 2-core split).

    key = jax.random.PRNGKey(0)
    k_t, k_x, k_y, k_p, k_w = jax.random.split(key, 5)
    t = jnp.sort(jax.random.uniform(k_t, (N_EVENTS,), jnp.float32, 0.0, 1.0))
    x = jax.random.randint(k_x, (N_EVENTS,), 0, WIDTH).astype(jnp.float32)
    y = jax.random.randint(k_y, (N_EVENTS,), 0, HEIGHT).astype(jnp.float32)
    p = jax.random.randint(k_p, (N_EVENTS,), 0, 2).astype(jnp.float32)
    events = jnp.stack([t, x, y, p], axis=1)            # (N, 4)

    params = _init_params(k_w)

    out = quantization_layer(events, params, num_bins=NUM_BINS,
                             height=HEIGHT, width=WIDTH, chunk=128, num_cores=2)
    out = jax.block_until_ready(out)

    ref = _reference(events, params, num_bins=NUM_BINS,
                     height=HEIGHT, width=WIDTH)
    assert out.shape == (1, NUM_BINS, HEIGHT, WIDTH)
    # bf16 operands on the 40x40 matmul (f32 accumulate) -> slightly relaxed tol.
    assert jnp.allclose(out, ref, atol=3e-2, rtol=3e-2), \
        f"max abs diff {jnp.max(jnp.abs(out - ref))}"

    print("KERNEL_OK")
</pallas_src>

<mosaic_0001>
module attributes {stable_mosaic.version = 11 : i64} {
  func.func @_quant_kernel(%arg0: i32, %arg1: i32, %arg2: memref<8x128xf32, #tpu.memory_space<vmem>>, %arg3: memref<40x4xf32, #tpu.memory_space<vmem>>, %arg4: memref<40x1xf32, #tpu.memory_space<vmem>>, %arg5: memref<40x40xbf16, #tpu.memory_space<vmem>>, %arg6: memref<40x1xf32, #tpu.memory_space<vmem>>, %arg7: memref<40x1xf32, #tpu.memory_space<vmem>>, %arg8: memref<1xf32, #tpu.memory_space<smem>>, %arg9: memref<1x5x256xf32, #tpu.memory_space<vmem>>) attributes {dimension_semantics = [#tpu.dimension_semantics<parallel>, #tpu.dimension_semantics<arbitrary>], iteration_bounds = array<i64: 2, 2>, scalar_prefetch = 0 : i64, scratch_operands = 0 : i64, tpu.core_type = #tpu.core_type<tc>, window_params = [{transform_indices = @transform_0, window_bounds = array<i64: 8, 128>}, {pipeline_mode = #tpu.pipeline_mode<synchronous>, transform_indices = @transform_1, window_bounds = array<i64: 40, 4>}, {pipeline_mode = #tpu.pipeline_mode<synchronous>, transform_indices = @transform_2, window_bounds = array<i64: 40, 1>}, {pipeline_mode = #tpu.pipeline_mode<synchronous>, transform_indices = @transform_3, window_bounds = array<i64: 40, 40>}, {pipeline_mode = #tpu.pipeline_mode<synchronous>, transform_indices = @transform_4, window_bounds = array<i64: 40, 1>}, {pipeline_mode = #tpu.pipeline_mode<synchronous>, transform_indices = @transform_5, window_bounds = array<i64: 40, 1>}, {transform_indices = @transform_6, window_bounds = array<i64: 1>}, {transform_indices = @transform_7, window_bounds = array<i64: 1, 5, 256>}]} {
    %c0_i32 = arith.constant 0 : i32
    %0 = arith.cmpi eq, %arg1, %c0_i32 : i32
    %1 = arith.extui %0 : i1 to i32
    %c0_i32_0 = arith.constant 0 : i32
    %2 = arith.cmpi ne, %1, %c0_i32_0 : i32
    scf.if %2 {
      %cst_36 = arith.constant 0.000000e+00 : f32
      %114 = vector.broadcast %cst_36 : f32 to vector<5x256xf32>
      %c0_37 = arith.constant 0 : index
      %c0_38 = arith.constant 0 : index
      %c0_39 = arith.constant 0 : index
      %115 = vector.load %arg9[%c0_37, %c0_38, %c0_39] : memref<1x5x256xf32, #tpu.memory_space<vmem>>, vector<1x5x256xf32>
      %116 = vector.shape_cast %115 : vector<1x5x256xf32> to vector<5x256xf32>
      %117 = vector.shape_cast %114 : vector<5x256xf32> to vector<1x5x256xf32>
      tpu.vector_store %arg9[%c0_37, %c0_38, %c0_39], %117 {strides = array<i32>} : memref<1x5x256xf32, #tpu.memory_space<vmem>>, vector<1x5x256xf32>,
    } else {
    }
    %c0 = arith.constant 0 : index
    %c0_1 = arith.constant 0 : index
    %3 = vector.load %arg2[%c0, %c0_1] : memref<8x128xf32, #tpu.memory_space<vmem>>, vector<8x128xf32>
    %4 = vector.extract_strided_slice %3 {offsets = [0, 0], sizes = [4, 128], strides = [1, 1]} : vector<8x128xf32> to vector<4x128xf32>
    %5 = vector.extract_strided_slice %3 {offsets = [0, 0], sizes = [1, 128], strides = [1, 1]} : vector<8x128xf32> to vector<1x128xf32>
    %6 = vector.extract_strided_slice %3 {offsets = [4, 0], sizes = [1, 128], strides = [1, 1]} : vector<8x128xf32> to vector<1x128xf32>
    %c0_2 = arith.constant 0 : index
    %c0_3 = arith.constant 0 : index
    %7 = vector.load %arg3[%c0_2, %c0_3] : memref<40x4xf32, #tpu.memory_space<vmem>>, vector<40x4xf32>
    %c0_4 = arith.constant 0 : index
    %c0_5 = arith.constant 0 : index
    %8 = vector.load %arg4[%c0_4, %c0_5] : memref<40x1xf32, #tpu.memory_space<vmem>>, vector<40x1xf32>
    %c0_6 = arith.constant 0 : index
    %c0_7 = arith.constant 0 : index
    %9 = vector.load %arg6[%c0_6, %c0_7] : memref<40x1xf32, #tpu.memory_space<vmem>>, vector<40x1xf32>
    %c0_8 = arith.constant 0 : index
    %c0_9 = arith.constant 0 : index
    %10 = vector.load %arg7[%c0_8, %c0_9] : memref<40x1xf32, #tpu.memory_space<vmem>>, vector<40x1xf32>
    %c0_10 = arith.constant 0 : index
    %11 = memref.load %arg8[%c0_10] : memref<1xf32, #tpu.memory_space<smem>>
    %cst = arith.constant dense<0.000000e+00> : vector<40x128xf32>
    %12 = tpu.matmul %7, %4, %cst {dimension_numbers = #tpu.dot_dimension_numbers<[1], [0], [0], [1], [0, 0, 1, 1], [], []>} : vector<40x4xf32>, vector<4x128xf32>, vector<40x128xf32> -> vector<40x128xf32>
    %13 = vector.broadcast %8 : vector<40x1xf32> to vector<40x128xf32>
    %14 = arith.addf %12, %13 : vector<40x128xf32>
    %15 = vector.extract_strided_slice %7 {offsets = [0, 0], sizes = [40, 1], strides = [1, 1]} : vector<40x4xf32> to vector<40x1xf32>
    %cst_11 = arith.constant 1.000000e-01 : f32
    %16 = vector.broadcast %cst_11 : f32 to vector<40x128xf32>
    %17 = arith.mulf %16, %14 : vector<40x128xf32>
    %18 = arith.maximumf %14, %17 : vector<40x128xf32>
    %19 = arith.truncf %18 : vector<40x128xf32> to vector<40x128xbf16>
    %cst_12 = arith.constant 2.500000e-01 : f32
    %20 = vector.broadcast %cst_12 : f32 to vector<40x1xf32>
    %21 = arith.mulf %20, %15 : vector<40x1xf32>
    %22 = vector.broadcast %21 : vector<40x1xf32> to vector<40x128xf32>
    %23 = arith.subf %14, %22 : vector<40x128xf32>
    %cst_13 = arith.constant 1.000000e-01 : f32
    %24 = vector.broadcast %cst_13 : f32 to vector<40x128xf32>
    %25 = arith.mulf %24, %23 : vector<40x128xf32>
    %26 = arith.maximumf %23, %25 : vector<40x128xf32>
    %27 = arith.truncf %26 : vector<40x128xf32> to vector<40x128xbf16>
    %cst_14 = arith.constant 5.000000e-01 : f32
    %28 = vector.broadcast %cst_14 : f32 to vector<40x1xf32>
    %29 = arith.mulf %28, %15 : vector<40x1xf32>
    %30 = vector.broadcast %29 : vector<40x1xf32> to vector<40x128xf32>
    %31 = arith.subf %14, %30 : vector<40x128xf32>
    %cst_15 = arith.constant 1.000000e-01 : f32
    %32 = vector.broadcast %cst_15 : f32 to vector<40x128xf32>
    %33 = arith.mulf %32, %31 : vector<40x128xf32>
    %34 = arith.maximumf %31, %33 : vector<40x128xf32>
    %35 = arith.truncf %34 : vector<40x128xf32> to vector<40x128xbf16>
    %cst_16 = arith.constant 7.500000e-01 : f32
    %36 = vector.broadcast %cst_16 : f32 to vector<40x1xf32>
    %37 = arith.mulf %36, %15 : vector<40x1xf32>
    %38 = vector.broadcast %37 : vector<40x1xf32> to vector<40x128xf32>
    %39 = arith.subf %14, %38 : vector<40x128xf32>
    %cst_17 = arith.constant 1.000000e-01 : f32
    %40 = vector.broadcast %cst_17 : f32 to vector<40x128xf32>
    %41 = arith.mulf %40, %39 : vector<40x128xf32>
    %42 = arith.maximumf %39, %41 : vector<40x128xf32>
    %43 = arith.truncf %42 : vector<40x128xf32> to vector<40x128xbf16>
    %cst_18 = arith.constant 1.000000e+00 : f32
    %44 = vector.broadcast %cst_18 : f32 to vector<40x1xf32>
    %45 = arith.mulf %44, %15 : vector<40x1xf32>
    %46 = vector.broadcast %45 : vector<40x1xf32> to vector<40x128xf32>
    %47 = arith.subf %14, %46 : vector<40x128xf32>
    %cst_19 = arith.constant 1.000000e-01 : f32
    %48 = vector.broadcast %cst_19 : f32 to vector<40x128xf32>
    %49 = arith.mulf %48, %47 : vector<40x128xf32>
    %50 = arith.maximumf %47, %49 : vector<40x128xf32>
    %51 = arith.truncf %50 : vector<40x128xf32> to vector<40x128xbf16>
    %52 = tpu.concatenate %19, %27, %35, %43, %51 in 1 : vector<40x128xbf16>, vector<40x128xbf16>, vector<40x128xbf16>, vector<40x128xbf16>, vector<40x128xbf16> -> vector<40x640xbf16>
    %c0_20 = arith.constant 0 : index
    %c0_21 = arith.constant 0 : index
    %53 = vector.load %arg5[%c0_20, %c0_21] : memref<40x40xbf16, #tpu.memory_space<vmem>>, vector<40x40xbf16>
    %cst_22 = arith.constant dense<0.000000e+00> : vector<40x640xf32>
    %54 = tpu.matmul %53, %52, %cst_22 {dimension_numbers = #tpu.dot_dimension_numbers<[1], [0], [0], [1], [0, 0, 1, 1], [], []>} : vector<40x40xbf16>, vector<40x640xbf16>, vector<40x640xf32> -> vector<40x640xf32>
    %55 = vector.broadcast %9 : vector<40x1xf32> to vector<40x640xf32>
    %56 = arith.addf %54, %55 : vector<40x640xf32>
    %cst_23 = arith.constant 1.000000e-01 : f32
    %57 = vector.broadcast %cst_23 : f32 to vector<40x640xf32>
    %58 = arith.mulf %57, %56 : vector<40x640xf32>
    %59 = arith.maximumf %56, %58 : vector<40x640xf32>
    %60 = vector.extract_strided_slice %59 {offsets = [0, 0], sizes = [40, 128], strides = [1, 1]} : vector<40x640xf32> to vector<40x128xf32>
    %61 = vector.broadcast %10 : vector<40x1xf32> to vector<40x128xf32>
    %62 = arith.mulf %60, %61 : vector<40x128xf32>
    %cst_24 = arith.constant dense<0.000000e+00> : vector<128xf32>
    %63 = vector.multi_reduction <add>, %62, %cst_24 [0] : vector<40x128xf32> to vector<128xf32>
    %64 = vector.shape_cast %63 : vector<128xf32> to vector<1x128xf32>
    %65 = vector.broadcast %11 : f32 to vector<1x128xf32>
    %66 = arith.addf %64, %65 : vector<1x128xf32>
    %67 = arith.mulf %5, %66 : vector<1x128xf32>
    %68 = vector.extract_strided_slice %59 {offsets = [0, 128], sizes = [40, 128], strides = [1, 1]} : vector<40x640xf32> to vector<40x128xf32>
    %69 = vector.broadcast %10 : vector<40x1xf32> to vector<40x128xf32>
    %70 = arith.mulf %68, %69 : vector<40x128xf32>
    %cst_25 = arith.constant dense<0.000000e+00> : vector<128xf32>
    %71 = vector.multi_reduction <add>, %70, %cst_25 [0] : vector<40x128xf32> to vector<128xf32>
    %72 = vector.shape_cast %71 : vector<128xf32> to vector<1x128xf32>
    %73 = vector.broadcast %11 : f32 to vector<1x128xf32>
    %74 = arith.addf %72, %73 : vector<1x128xf32>
    %75 = arith.mulf %5, %74 : vector<1x128xf32>
    %76 = vector.extract_strided_slice %59 {offsets = [0, 256], sizes = [40, 128], strides = [1, 1]} : vector<40x640xf32> to vector<40x128xf32>
    %77 = vector.broadcast %10 : vector<40x1xf32> to vector<40x128xf32>
    %78 = arith.mulf %76, %77 : vector<40x128xf32>
    %cst_26 = arith.constant dense<0.000000e+00> : vector<128xf32>
    %79 = vector.multi_reduction <add>, %78, %cst_26 [0] : vector<40x128xf32> to vector<128xf32>
    %80 = vector.shape_cast %79 : vector<128xf32> to vector<1x128xf32>
    %81 = vector.broadcast %11 : f32 to vector<1x128xf32>
    %82 = arith.addf %80, %81 : vector<1x128xf32>
    %83 = arith.mulf %5, %82 : vector<1x128xf32>
    %84 = vector.extract_strided_slice %59 {offsets = [0, 384], sizes = [40, 128], strides = [1, 1]} : vector<40x640xf32> to vector<40x128xf32>
    %85 = vector.broadcast %10 : vector<40x1xf32> to vector<40x128xf32>
    %86 = arith.mulf %84, %85 : vector<40x128xf32>
    %cst_27 = arith.constant dense<0.000000e+00> : vector<128xf32>
    %87 = vector.multi_reduction <add>, %86, %cst_27 [0] : vector<40x128xf32> to vector<128xf32>
    %88 = vector.shape_cast %87 : vector<128xf32> to vector<1x128xf32>
    %89 = vector.broadcast %11 : f32 to vector<1x128xf32>
    %90 = arith.addf %88, %89 : vector<1x128xf32>
    %91 = arith.mulf %5, %90 : vector<1x128xf32>
    %92 = vector.extract_strided_slice %59 {offsets = [0, 512], sizes = [40, 128], strides = [1, 1]} : vector<40x640xf32> to vector<40x128xf32>
    %93 = vector.broadcast %10 : vector<40x1xf32> to vector<40x128xf32>
    %94 = arith.mulf %92, %93 : vector<40x128xf32>
    %cst_28 = arith.constant dense<0.000000e+00> : vector<128xf32>
    %95 = vector.multi_reduction <add>, %94, %cst_28 [0] : vector<40x128xf32> to vector<128xf32>
    %96 = vector.shape_cast %95 : vector<128xf32> to vector<1x128xf32>
    %97 = vector.broadcast %11 : f32 to vector<1x128xf32>
    %98 = arith.addf %96, %97 : vector<1x128xf32>
    %99 = arith.mulf %5, %98 : vector<1x128xf32>
    %100 = tpu.concatenate %67, %75, %83, %91, %99 in 0 : vector<1x128xf32>, vector<1x128xf32>, vector<1x128xf32>, vector<1x128xf32>, vector<1x128xf32> -> vector<5x128xf32>
    %101 = tpu.iota {dimensions = array<i32: 0>} : vector<256x128xi32>
    %102 = arith.fptosi %6 : vector<1x128xf32> to vector<1x128xi32>
    %103 = vector.broadcast %102 : vector<1x128xi32> to vector<256x128xi32>
    %104 = arith.cmpi eq, %101, %103 : vector<256x128xi32>
    %105 = arith.extui %104 : vector<256x128xi1> to vector<256x128xi32>
    %106 = arith.sitofp %105 : vector<256x128xi32> to vector<256x128xf32>
    %c0_29 = arith.constant 0 : index
    %c0_30 = arith.constant 0 : index
    %c0_31 = arith.constant 0 : index
    %107 = vector.load %arg9[%c0_29, %c0_30, %c0_31] : memref<1x5x256xf32, #tpu.memory_space<vmem>>, vector<1x5x256xf32>
    %108 = vector.shape_cast %107 : vector<1x5x256xf32> to vector<5x256xf32>
    %cst_32 = arith.constant dense<0.000000e+00> : vector<5x256xf32>
    %109 = tpu.matmul %100, %106, %cst_32 {dimension_numbers = #tpu.dot_dimension_numbers<[1], [1], [0], [0], [0, 0, 1, 0], [], []>} : vector<5x128xf32>, vector<256x128xf32>, vector<5x256xf32> -> vector<5x256xf32>
    %110 = arith.addf %108, %109 : vector<5x256xf32>
    %c0_33 = arith.constant 0 : index
    %c0_34 = arith.constant 0 : index
    %c0_35 = arith.constant 0 : index
    %111 = vector.load %arg9[%c0_33, %c0_34, %c0_35] : memref<1x5x256xf32, #tpu.memory_space<vmem>>, vector<1x5x256xf32>
    %112 = vector.shape_cast %111 : vector<1x5x256xf32> to vector<5x256xf32>
    %113 = vector.shape_cast %110 : vector<5x256xf32> to vector<1x5x256xf32>
    tpu.vector_store %arg9[%c0_33, %c0_34, %c0_35], %113 {strides = array<i32>} : memref<1x5x256xf32, #tpu.memory_space<vmem>>, vector<1x5x256xf32>,
    return
  }
  func.func @transform_0(%arg0: i32, %arg1: i32) -> (i32, i32) {
    %c2_i32 = arith.constant 2 : i32
    %0 = arith.muli %arg0, %c2_i32 : i32
    %1 = arith.addi %0, %arg1 : i32
    %c0_i32 = arith.constant 0 : i32
    %c0_i32_0 = arith.constant 0 : i32
    return %c0_i32, %1 : i32, i32
  }
  func.func @transform_1(%arg0: i32, %arg1: i32) -> (i32, i32) {
    %c0_i32 = arith.constant 0 : i32
    %c0_i32_0 = arith.constant 0 : i32
    %c0_i32_1 = arith.constant 0 : i32
    return %c0_i32, %c0_i32_0 : i32, i32
  }
  func.func @transform_2(%arg0: i32, %arg1: i32) -> (i32, i32) {
    %c0_i32 = arith.constant 0 : i32
    %c0_i32_0 = arith.constant 0 : i32
    %c0_i32_1 = arith.constant 0 : i32
    return %c0_i32, %c0_i32_0 : i32, i32
  }
  func.func @transform_3(%arg0: i32, %arg1: i32) -> (i32, i32) {
    %c0_i32 = arith.constant 0 : i32
    %c0_i32_0 = arith.constant 0 : i32
    %c0_i32_1 = arith.constant 0 : i32
    return %c0_i32, %c0_i32_0 : i32, i32
  }
  func.func @transform_4(%arg0: i32, %arg1: i32) -> (i32, i32) {
    %c0_i32 = arith.constant 0 : i32
    %c0_i32_0 = arith.constant 0 : i32
    %c0_i32_1 = arith.constant 0 : i32
    return %c0_i32, %c0_i32_0 : i32, i32
  }
  func.func @transform_5(%arg0: i32, %arg1: i32) -> (i32, i32) {
    %c0_i32 = arith.constant 0 : i32
    %c0_i32_0 = arith.constant 0 : i32
    %c0_i32_1 = arith.constant 0 : i32
    return %c0_i32, %c0_i32_0 : i32, i32
  }
  func.func @transform_6(%arg0: i32, %arg1: i32) -> i32 {
    %c0_i32 = arith.constant 0 : i32
    %c0_i32_0 = arith.constant 0 : i32
    return %c0_i32 : i32
  }
  func.func @transform_7(%arg0: i32, %arg1: i32) -> (i32, i32, i32) {
    %c0_i32 = arith.constant 0 : i32
    %c0_i32_0 = arith.constant 0 : i32
    %c0_i32_1 = arith.constant 0 : i32
    return %arg0, %c0_i32, %c0_i32_0 : i32, i32, i32
  }
}

</mosaic_0001>

<llo_original>
// kernel: tpu_custom_call.1
$region0: #{tpu_custom_call.1}
  #allocation0 [shape = 'u32[]', space=smem, size = 0x4, offset = 0x4, fixed_abs, tag = 'smem constant byte address 0x4 - core index']
  #allocation1 [shape = 'u32[144,128]{1,0:T(1,128)}', space=vmem, size = 0x12000, scoped, tag = 'internal scratch']
  #allocation2 [shape = 'f32[1]{0:T(128)S(6)}', space=smem, size = 0x200, scoped, tag = 'scoped memory for tpu_custom_call.1']
  %s0 = inlined_call_operand.vmem [shape: f32[8,512], index: 0, kind: input, shape index: {}]
  %s1 = inlined_call_operand.vmem [shape: f32[40,4], index: 1, kind: input, shape index: {}]
  %s2 = inlined_call_operand.vmem [shape: f32[40,1], index: 2, kind: input, shape index: {}]
  %s3 = inlined_call_operand.vmem [shape: bf16[40,40], index: 3, kind: input, shape index: {}]
  %s4 = inlined_call_operand.vmem [shape: f32[40,1], index: 4, kind: input, shape index: {}]
  %s5 = inlined_call_operand.vmem [shape: f32[40,1], index: 5, kind: input, shape index: {}]
  %s6 = inlined_call_operand.<no memory space> [shape: f32[1], index: 6, kind: input, shape index: {}]
  %s7 = inlined_call_operand.vmem [shape: f32[2,5,256], index: 7, kind: output, shape index: {}]
  %s8 = sld [smem:[#allocation0]]
  $region65: #{tpu_custom_call.1} parent=0
    _
  %s10 = ssub.s32 1, %s8
  %s11 = scalar_select 0, %s10, %s8
  %12 = sst [smem:[#allocation2]] %s6
  loop: start=0, step=1, limit=6
  $region2: #{tpu_custom_call.1} parent=0 // loop_pre_header
    _
  $region3: #{tpu_custom_call.1} parent=0 // loop_header
    %s14 = sphi 0, %s18
    %p15 = scmp.ge.s32.totalorder %s14, 6
    %s21 = sphi 0, %s33
    %s22 = sphi 0, %s29
    %s23 = sphi 0, %s21
    %s24 = sphi 0, %s22
    %s25 = sphi 0, %s23
    %s26 = sphi 0, %s24
    %s40 = sphi 0, %s42
    %s43 = sphi 0, %s40
    %s44 = sphi 0, %s43
    %s60 = sphi 0, %s44
    %s64 = sphi 0, %s64
    %s66 = sphi 0, %s64
    %s67 = sphi 0, %s66
    %s81 = sphi 0, %s67
    %s85 = sphi 0, %s85
    %s87 = sphi 0, %s85
    %s88 = sphi 0, %s87
    %s102 = sphi 0, %s88
    %s106 = sphi 0, %s106
    %s108 = sphi 0, %s106
    %s109 = sphi 0, %s108
    %s123 = sphi 0, %s109
    %s127 = sphi 0, %s127
    %s129 = sphi 0, %s127
    %s130 = sphi 0, %s129
    %s144 = sphi 0, %s130
    %s148 = sphi 0, %s148
    %s150 = sphi 0, %s148
    %s151 = sphi 0, %s150
    %s165 = sphi 0, %s151
    %s169 = sphi 0, %s169
    %s171 = sphi 0, %s169
    %s172 = sphi 0, %s171
    %s186 = sphi 0, %s172
    %s192 = sphi 0, %s194
    %s195 = sphi 0, %s192
    %s196 = sphi 0, %s195
    %s212 = sphi 0, %s196
  $region4: #{tpu_custom_call.1} parent=0 // loop_header_branch
    %17 = sbr.rel (%p15) target = $region8
  $region5: #{tpu_custom_call.1} parent=0 // loop_body
    %s19 = ssub.s32 %s14, 1
    %s20 = ssub.s32 %s14, 2
    %s27 = sadd.s32 1, %s22
    %p28 = scmp.ge.s32.totalorder %s27, 2
    %s29 = scalar_select %p28, 0, %s27
    %s30 = sadd.s32 1, %s21
    %s31 = scalar_select %p28, %s30, %s21
    %p32 = scmp.ge.s32.totalorder %s31, 2
    %s33 = scalar_select %p32, 0, %s31
    %s34 = smul.u32 %s21, 2
    %s35 = sadd.s32 %s34, %s22
    %s36 = smul.u32 %s33, 2
    %s37 = sadd.s32 %s36, %s29
    %s38 = ssub.s32 %s35, %s37
    %p39 = scmp.eq.s32.totalorder %s38, 0
    %s41 = sadd.s32 %s40, 1
    %s42 = scalar_select %p39, %s40, %s41
    %p45 = pneg %p39
    %p46 = scmp.eq.s32.totalorder %s14, 3
    %p47 = por %p45, %p46
    %p48 = scmp.ne.s32.totalorder %s40, %s43
    %p49 = scmp.eq.s32.totalorder %s14, 0
    %p50 = por %p48, %p49
    %p51 = scmp.ne.s32.totalorder %s40, %s43
    %p52 = scmp.eq.s32.totalorder %s19, 3
    %p53 = por %p51, %p52
    %p54 = scmp.ne.s32.totalorder %s43, %s44
    %p55 = scmp.eq.s32.totalorder %s19, 0
    %p56 = por %p54, %p55
    %p57 = scmp.ne.s32.totalorder %s43, %s44
    %p58 = scmp.eq.s32.totalorder %s20, 3
    %p59 = por %p57, %p58
    %p61 = scmp.ne.s32.totalorder %s44, %s60
    %p62 = scmp.eq.s32.totalorder %s20, 0
    %p63 = por %p61, %p62
    %s65 = sadd.s32 %s64, 1
    %p68 = scmp.eq.s32.totalorder %s14, 3
    %p69 = scmp.ne.s32.totalorder %s64, %s66
    %p70 = scmp.eq.s32.totalorder %s14, 0
    %p71 = por %p69, %p70
    %p72 = scmp.ne.s32.totalorder %s64, %s66
    %p73 = scmp.eq.s32.totalorder %s19, 3
    %p74 = por %p72, %p73
    %p75 = scmp.ne.s32.totalorder %s66, %s67
    %p76 = scmp.eq.s32.totalorder %s19, 0
    %p77 = por %p75, %p76
    %p78 = scmp.ne.s32.totalorder %s66, %s67
    %p79 = scmp.eq.s32.totalorder %s20, 3
    %p80 = por %p78, %p79
    %p82 = scmp.ne.s32.totalorder %s67, %s81
    %p83 = scmp.eq.s32.totalorder %s20, 0
    %p84 = por %p82, %p83
    %s86 = sadd.s32 %s85, 1
    %p89 = scmp.eq.s32.totalorder %s14, 3
    %p90 = scmp.ne.s32.totalorder %s85, %s87
    %p91 = scmp.eq.s32.totalorder %s14, 0
    %p92 = por %p90, %p91
    %p93 = scmp.ne.s32.totalorder %s85, %s87
    %p94 = scmp.eq.s32.totalorder %s19, 3
    %p95 = por %p93, %p94
    %p96 = scmp.ne.s32.totalorder %s87, %s88
    %p97 = scmp.eq.s32.totalorder %s19, 0
    %p98 = por %p96, %p97
    %p99 = scmp.ne.s32.totalorder %s87, %s88
    %p100 = scmp.eq.s32.totalorder %s20, 3
    %p101 = por %p99, %p100
    %p103 = scmp.ne.s32.totalorder %s88, %s102
    %p104 = scmp.eq.s32.totalorder %s20, 0
    %p105 = por %p103, %p104
    %s107 = sadd.s32 %s106, 1
    %p110 = scmp.eq.s32.totalorder %s14, 3
    %p111 = scmp.ne.s32.totalorder %s106, %s108
    %p112 = scmp.eq.s32.totalorder %s14, 0
    %p113 = por %p111, %p112
    %p114 = scmp.ne.s32.totalorder %s106, %s108
    %p115 = scmp.eq.s32.totalorder %s19, 3
    %p116 = por %p114, %p115
    %p117 = scmp.ne.s32.totalorder %s108, %s109
    %p118 = scmp.eq.s32.totalorder %s19, 0
    %p119 = por %p117, %p118
    %p120 = scmp.ne.s32.totalorder %s108, %s109
    %p121 = scmp.eq.s32.totalorder %s20, 3
    %p122 = por %p120, %p121
    %p124 = scmp.ne.s32.totalorder %s109, %s123
    %p125 = scmp.eq.s32.totalorder %s20, 0
    %p126 = por %p124, %p125
    %s128 = sadd.s32 %s127, 1
    %p131 = scmp.eq.s32.totalorder %s14, 3
    %p132 = scmp.ne.s32.totalorder %s127, %s129
    %p133 = scmp.eq.s32.totalorder %s14, 0
    %p134 = por %p132, %p133
    %p135 = scmp.ne.s32.totalorder %s127, %s129
    %p136 = scmp.eq.s32.totalorder %s19, 3
    %p137 = por %p135, %p136
    %p138 = scmp.ne.s32.totalorder %s129, %s130
    %p139 = scmp.eq.s32.totalorder %s19, 0
    %p140 = por %p138, %p139
    %p141 = scmp.ne.s32.totalorder %s129, %s130
    %p142 = scmp.eq.s32.totalorder %s20, 3
    %p143 = por %p141, %p142
    %p145 = scmp.ne.s32.totalorder %s130, %s144
    %p146 = scmp.eq.s32.totalorder %s20, 0
    %p147 = por %p145, %p146
    %s149 = sadd.s32 %s148, 1
    %p152 = scmp.eq.s32.totalorder %s14, 3
    %p153 = scmp.ne.s32.totalorder %s148, %s150
    %p154 = scmp.eq.s32.totalorder %s14, 0
    %p155 = por %p153, %p154
    %p156 = scmp.ne.s32.totalorder %s148, %s150
    %p157 = scmp.eq.s32.totalorder %s19, 3
    %p158 = por %p156, %p157
    %p159 = scmp.ne.s32.totalorder %s150, %s151
    %p160 = scmp.eq.s32.totalorder %s19, 0
    %p161 = por %p159, %p160
    %p162 = scmp.ne.s32.totalorder %s150, %s151
    %p163 = scmp.eq.s32.totalorder %s20, 3
    %p164 = por %p162, %p163
    %p166 = scmp.ne.s32.totalorder %s151, %s165
    %p167 = scmp.eq.s32.totalorder %s20, 0
    %p168 = por %p166, %p167
    %s170 = sadd.s32 %s169, 1
    %p173 = scmp.eq.s32.totalorder %s14, 3
    %p174 = scmp.ne.s32.totalorder %s169, %s171
    %p175 = scmp.eq.s32.totalorder %s14, 0
    %p176 = por %p174, %p175
    %p177 = scmp.ne.s32.totalorder %s169, %s171
    %p178 = scmp.eq.s32.totalorder %s19, 3
    %p179 = por %p177, %p178
    %p180 = scmp.ne.s32.totalorder %s171, %s172
    %p181 = scmp.eq.s32.totalorder %s19, 0
    %p182 = por %p180, %p181
    %p183 = scmp.ne.s32.totalorder %s171, %s172
    %p184 = scmp.eq.s32.totalorder %s20, 3
    %p185 = por %p183, %p184
    %p187 = scmp.ne.s32.totalorder %s172, %s186
    %p188 = scmp.eq.s32.totalorder %s20, 0
    %p189 = por %p187, %p188
    %s190 = ssub.s32 %s21, %s33
    %p191 = scmp.eq.s32.totalorder %s190, 0
    %s193 = sadd.s32 %s192, 1
    %s194 = scalar_select %p191, %s192, %s193
    %p197 = pneg %p191
    %p198 = scmp.eq.s32.totalorder %s14, 3
    %p199 = por %p197, %p198
    %p200 = scmp.ne.s32.totalorder %s192, %s195
    %p201 = scmp.eq.s32.totalorder %s14, 0
    %p202 = por %p200, %p201
    %p203 = scmp.ne.s32.totalorder %s192, %s195
    %p204 = scmp.eq.s32.totalorder %s19, 3
    %p205 = por %p203, %p204
    %p206 = scmp.ne.s32.totalorder %s195, %s196
    %p207 = scmp.eq.s32.totalorder %s19, 0
    %p208 = por %p206, %p207
    %p209 = scmp.ne.s32.totalorder %s195, %s196
    %p210 = scmp.eq.s32.totalorder %s20, 3
    %p211 = por %p209, %p210
    %p213 = scmp.ne.s32.totalorder %s196, %s212
    %p214 = scmp.eq.s32.totalorder %s20, 0
    %p215 = por %p213, %p214
    %p216 = scmp.le.s32.totalorder 1, %s14
    %p217 = scmp.lt.s32.totalorder %s14, 5
    %p218 = pnand %p216, %p217
    %p219 = pneg %p218
    // Predicated region
    $region9: #{tpu_custom_call.1} parent=5 // pred_check
      _
    $region10: #{tpu_custom_call.1} parent=5 // pred_check_branch
      %221 = sbr.rel (%p218) target = $region12
    $region11: #{tpu_custom_call.1} parent=5 // pred_region
      %s222 = ssub.s32 %s14, 1
      // Predicated region
      $region13: #{tpu_custom_call.1} parent=11 // pred_check
        %p223 = pneg %p77
      $region14: #{tpu_custom_call.1} parent=11 // pred_check_branch
        %225 = sbr.rel (%p223) target = $region16
      $region15: #{tpu_custom_call.1} parent=11 // pred_region
        _
      $region16: #{tpu_custom_call.1} parent=11 // pred_fallthru
        _
      // Predicated region
      $region17: #{tpu_custom_call.1} parent=11 // pred_check
        %p226 = pneg %p98
      $region18: #{tpu_custom_call.1} parent=11 // pred_check_branch
        %228 = sbr.rel (%p226) target = $region20
      $region19: #{tpu_custom_call.1} parent=11 // pred_region
        _
      $region20: #{tpu_custom_call.1} parent=11 // pred_fallthru
        _
      // Predicated region
      $region21: #{tpu_custom_call.1} parent=11 // pred_check
        %p229 = pneg %p119
      $region22: #{tpu_custom_call.1} parent=11 // pred_check_branch
        %231 = sbr.rel (%p229) target = $region24
      $region23: #{tpu_custom_call.1} parent=11 // pred_region
        _
      $region24: #{tpu_custom_call.1} parent=11 // pred_fallthru
        _
      // Predicated region
      $region25: #{tpu_custom_call.1} parent=11 // pred_check
        %p232 = pneg %p140
      $region26: #{tpu_custom_call.1} parent=11 // pred_check_branch
        %234 = sbr.rel (%p232) target = $region28
      $region27: #{tpu_custom_call.1} parent=11 // pred_region
        _
      $region28: #{tpu_custom_call.1} parent=11 // pred_fallthru
        _
      // Predicated region
      $region29: #{tpu_custom_call.1} parent=11 // pred_check
        %p235 = pneg %p161
      $region30: #{tpu_custom_call.1} parent=11 // pred_check_branch
        %237 = sbr.rel (%p235) target = $region32
      $region31: #{tpu_custom_call.1} parent=11 // pred_region
        _
      $region32: #{tpu_custom_call.1} parent=11 // pred_fallthru
        _
      // Predicated region
      $region33: #{tpu_custom_call.1} parent=11 // pred_check
        %p238 = pneg %p182
      $region34: #{tpu_custom_call.1} parent=11 // pred_check_branch
        %240 = sbr.rel (%p238) target = $region36
      $region35: #{tpu_custom_call.1} parent=11 // pred_region
        _
      $region36: #{tpu_custom_call.1} parent=11 // pred_fallthru
        _
    $region12: #{tpu_custom_call.1} parent=5 // pred_fallthru
      _
    %p241 = scmp.lt.s32.totalorder %s14, 4
    // Predicated region
    $region37: #{tpu_custom_call.1} parent=5 // pred_check
      %p242 = pneg %p241
    $region38: #{tpu_custom_call.1} parent=5 // pred_check_branch
      %244 = sbr.rel (%p242) target = $region40
    $region39: #{tpu_custom_call.1} parent=5 // pred_region
      // Predicated region
      $region41: #{tpu_custom_call.1} parent=39 // pred_check
        %p245 = pneg %p50
      $region42: #{tpu_custom_call.1} parent=39 // pred_check_branch
        %247 = sbr.rel (%p245) target = $region44
      $region43: #{tpu_custom_call.1} parent=39 // pred_region
        %s248 = smul.u32 %s21, 2
        %s249 = sadd.s32 %s248, %s22
        %p250 = scmp.lt.s32.totalorder %s249, 3
        %s251 = scalar_select %p250, %s249, 3
        %s252 = smul.addr %s251, 8
        %s253 = scalar_lea.vmem %s0, %s252
        %s254 = smul.u32 %s21, 2
        %s255 = sadd.s32 %s254, %s22
      $region44: #{tpu_custom_call.1} parent=39 // pred_fallthru
        _
    $region40: #{tpu_custom_call.1} parent=5 // pred_fallthru
      _
    %p256 = scmp.le.s32.totalorder 1, %s14
    %p257 = scmp.lt.s32.totalorder %s14, 5
    %p258 = pnand %p256, %p257
    %p259 = pneg %p258
    // Predicated region
    $region45: #{tpu_custom_call.1} parent=5 // pred_check
      _
    $region46: #{tpu_custom_call.1} parent=5 // pred_check_branch
      %261 = sbr.rel (%p258) target = $region48
    $region47: #{tpu_custom_call.1} parent=5 // pred_region
      %s262 = ssub.s32 %s14, 1
      %s263 = smul.u32 %s23, 2
      %s264 = sadd.s32 %s263, %s24
      %p265 = scmp.lt.s32.totalorder %s264, 3
      %s266 = scalar_select %p265, %s264, 3
      %s267 = smul.addr %s266, 8
      %s268 = scalar_lea.vmem %s0, %s267
      %p269 = pneg %p56
      %p270 = pneg %p53
      %p271 = pneg %p77
      %p272 = pneg %p74
      %p273 = pneg %p98
      %p274 = pneg %p95
      %p275 = pneg %p119
      %p276 = pneg %p116
      %p277 = pneg %p140
      %p278 = pneg %p137
      %p279 = pneg %p161
      %p280 = pneg %p158
      %p281 = pneg %p182
      %p282 = pneg %p179
      %p283 = pneg %p208
      %p284 = pneg %p205
      %p285 = scmp.lt.s32.totalorder %s23, 1
      %s286 = scalar_select %p285, %s23, 1
      %s287 = smul.addr %s286, 2
      %s288 = smul.addr %s287, 8
      %s289 = scalar_lea.vmem %s7, %s288
      %s290 = smul.u32 %s23, 2
      %s291 = sadd.s32 %s290, %s24
      %p292 = scmp.lt.s32.totalorder %s291, 3
      %s293 = scalar_select %p292, %s291, 3
      %s294 = smul.addr %s293, 8
      %s295 = scalar_lea.vmem %s0, %s294
      %s296 = smul.u32 %s23, 2
      %s297 = sadd.s32 %s296, %s24
      %p298 = scmp.lt.s32.totalorder %s23, 1
      %s299 = scalar_select %p298, %s23, 1
      %s300 = smul.addr %s299, 2
      %s301 = smul.addr %s300, 8
      %s302 = scalar_lea.vmem %s7, %s301
      %p304 = scmp.eq.s32.totalorder %s24, 0
      // Predicated region
      $region49: #{tpu_custom_call.1} parent=47 // pred_check
        %p305 = pneg %p304
      $region50: #{tpu_custom_call.1} parent=47 // pred_check_branch
        %307 = sbr.rel (%p305) target = $region52
      $region51: #{tpu_custom_call.1} parent=47 // pred_region
        %308 = vst [vmem:[%s302] sm:$0x1f] 0.0
        %309 = vst [vmem:[%s302 + $0x8] sm:$0x1f] 0.0
      $region52: #{tpu_custom_call.1} parent=47 // pred_fallthru
        _
      %v310 = vld [vmem:[%s295] sm:$0xff]
      %v311 = vld [vmem:[%s1] sm:$0xff]
      %v312 = vld [vmem:[%s1 + $0x8] sm:$0xff]
      %v313 = vld [vmem:[%s1 + $0x10] sm:$0xff]
      %v314 = vld [vmem:[%s1 + $0x18] sm:$0xff]
      %v315 = vld [vmem:[%s1 + $0x20] sm:$0xff]
      %v316 = vld [vmem:[%s2] sm:$0xff]
      %v317 = vld [vmem:[%s2 + $0x8] sm:$0xff]
      %v318 = vld [vmem:[%s2 + $0x10] sm:$0xff]
      %v319 = vld [vmem:[%s2 + $0x18] sm:$0xff]
      %v320 = vld [vmem:[%s2 + $0x20] sm:$0xff]
      %v321 = vld [vmem:[%s4] sm:$0xff]
      %v322 = vld [vmem:[%s4 + $0x8] sm:$0xff]
      %v323 = vld [vmem:[%s4 + $0x10] sm:$0xff]
      %v324 = vld [vmem:[%s4 + $0x18] sm:$0xff]
      %v325 = vld [vmem:[%s4 + $0x20] sm:$0xff]
      %v326 = vld [vmem:[%s5] sm:$0xff]
      %v327 = vld [vmem:[%s5 + $0x8] sm:$0xff]
      %v328 = vld [vmem:[%s5 + $0x10] sm:$0xff]
      %v329 = vld [vmem:[%s5 + $0x18] sm:$0xff]
      %v330 = vld [vmem:[%s5 + $0x20] sm:$0xff]
      %s331 = sld [smem:[#allocation2]]
      %333 = vset.pattern.permute.xlu0 0
      %334 = vperm.xlu0 %333, %v316
      %v335 = vpop.permute.xlu0 %334
      %338 = vset.pattern.permute.xlu0 0
      %339 = vperm.xlu0 %338, %v317
      %v340 = vpop.permute.xlu0 %339
      %343 = vset.pattern.permute.xlu0 0
      %344 = vperm.xlu0 %343, %v318
      %v345 = vpop.permute.xlu0 %344
      %348 = vset.pattern.permute.xlu0 0
      %349 = vperm.xlu0 %348, %v319
      %v350 = vpop.permute.xlu0 %349
      %353 = vset.pattern.permute.xlu0 0
      %354 = vperm.xlu0 %353, %v320
      %v355 = vpop.permute.xlu0 %354
      %vm357 = vcmask 31744
      %v359 = vsel %vm357, %v311, 0
      %v362 = vsel %vm357, %v312, 0
      %v365 = vsel %vm357, %v313, 0
      %v368 = vsel %vm357, %v314, 0
      %v371 = vsel %vm357, %v315, 0
      %vm373 = vcmask 1043456
      %v375 = vsel %vm373, %v310, 0
      %377 = vmatprep.subr.mxu0 0.0
      %378 = vmatpush1.msra.mxu0 %v375
      %379 = vmatprep.subr.mxu0 0.0
      %380 = vmatpush1.msra.mxu0 0.0
      %381 = vmatprep.subr.mxu0 0.0
      %382 = vmatpush1.msra.mxu0 0.0
      %383 = vmatprep.subr.mxu0 0.0
      %384 = vmatpush1.msra.mxu0 0.0
      %385 = vmatprep.subr.mxu0 0.0
      %386 = vmatpush1.msra.mxu0 0.0
      %387 = vmatprep.subr.mxu0 0.0
      %388 = vmatpush1.msra.mxu0 0.0
      %389 = vmatprep.subr.mxu0 0.0
      %390 = vmatpush1.msra.mxu0 0.0
      %391 = vmatprep.subr.mxu0 0.0
      %392 = vmatpush1.msra.mxu0 0.0
      %393 = vmatprep.subr.mxu0 0.0
      %394 = vmatpush1.msra.mxu0 0.0
      %395 = vmatprep.subr.mxu0 0.0
      %396 = vmatpush1.msra.mxu0 0.0
      %397 = vmatprep.subr.mxu0 0.0
      %398 = vmatpush1.msra.mxu0 0.0
      %399 = vmatprep.subr.mxu0 0.0
      %400 = vmatpush1.msra.mxu0 0.0
      %401 = vmatprep.subr.mxu0 0.0
      %402 = vmatpush1.msra.mxu0 0.0
      %403 = vmatprep.subr.mxu0 0.0
      %404 = vmatpush1.msra.mxu0 0.0
      %405 = vmatprep.subr.mxu0 0.0
      %406 = vmatpush1.msra.mxu0 0.0
      %407 = vmatprep.subr.mxu0 0.0
      %408 = vmatpush1.msra.mxu0 0.0
      %409 = vmatprep.subr.mxu0 0.0
      %410 = vmatpush1.msra.mxu0 0.0
      %411 = vmatprep.subr.mxu0 0.0
      %412 = vmatpush1.msra.mxu0 0.0
      %413 = vmatprep.subr.mxu0 0.0
      %414 = vmatpush1.msra.mxu0 0.0
      %415 = vmatprep.subr.mxu0 0.0
      %416 = vmatpush1.msra.mxu0 0.0
      %417 = vmatprep.subr.mxu0 0.0
      %418 = vmatpush1.msra.mxu0 0.0
      %419 = vmatprep.subr.mxu0 0.0
      %420 = vmatpush1.msra.mxu0 0.0
      %421 = vmatprep.subr.mxu0 0.0
      %422 = vmatpush1.msra.mxu0 0.0
      %423 = vmatprep.subr.mxu0 0.0
      %424 = vmatpush1.msra.mxu0 0.0
      %425 = vmatprep.subr.mxu0 0.0
      %426 = vmatpush1.msra.mxu0 0.0
      %427 = vmatprep.subr.mxu0 0.0
      %428 = vmatpush1.msra.mxu0 0.0
      %429 = vmatprep.subr.mxu0 0.0
      %430 = vmatpush1.msra.mxu0 0.0
      %431 = vmatprep.subr.mxu0 0.0
      %432 = vmatpush1.msra.mxu0 0.0
      %433 = vmatprep.subr.mxu0 0.0
      %434 = vmatpush1.msra.mxu0 0.0
      %435 = vmatprep.subr.mxu0 0.0
      %436 = vmatpush1.msra.mxu0 0.0
      %437 = vmatprep.subr.mxu0 0.0
      %438 = vmatpush1.msra.mxu0 0.0
      %439 = vmatprep.subr.mxu0 0.0
      %440 = vmatpush1.msra.mxu0 0.0
      %441 = vmatprep.mubr.f32.mxu0 0.0
      %442 = vmatmul.mubr.f32.gmra.mrb[0].mxu0 %v359
      %v443 = vpop.f32.mrb[0].mxu0
      %v444 = vadd.f32 %v335, %v443
      %v445 = vpop.f32.mrb[0].mxu0
      %446 = vmatprep.mubr.f32.mxu0 0.0
      %447 = vmatmul.mubr.f32.gmra.mrb[0].mxu0 %v362
      %v448 = vpop.f32.mrb[0].mxu0
      %v449 = vadd.f32 %v340, %v448
      %v450 = vpop.f32.mrb[0].mxu0
      %451 = vmatprep.mubr.f32.mxu0 0.0
      %452 = vmatmul.mubr.f32.gmra.mrb[0].mxu0 %v365
      %v453 = vpop.f32.mrb[0].mxu0
      %v454 = vadd.f32 %v345, %v453
      %v455 = vpop.f32.mrb[0].mxu0
      %456 = vmatprep.mubr.f32.mxu0 0.0
      %457 = vmatmul.mubr.f32.gmra.mrb[0].mxu0 %v368
      %v458 = vpop.f32.mrb[0].mxu0
      %v459 = vadd.f32 %v350, %v458
      %v460 = vpop.f32.mrb[0].mxu0
      %461 = vmatprep.mubr.f32.mxu0 0.0
      %462 = vmatmul.mubr.f32.gmra.mrb[0].mxu0 %v371
      %v463 = vpop.f32.mrb[0].mxu0
      %v464 = vadd.f32 %v355, %v463
      %v465 = vpop.f32.mrb[0].mxu0
      %466 = vdwg.mxu0
      %v467 = vmul.f32 %v444, 0.1
      %v468 = vmul.f32 %v449, 0.1
      %v469 = vmul.f32 %v454, 0.1
      %v470 = vmul.f32 %v459, 0.1
      %v471 = vmul.f32 %v464, 0.1
      %v472 = vmax.f32 %v444, %v467
      %v473 = vmax.f32 %v449, %v468
      %v474 = vmax.f32 %v454, %v469
      %v475 = vmax.f32 %v459, %v470
      %v476 = vmax.f32 %v464, %v471
      %v477 = vpack.c.bf16 %v473, %v472
      %v478 = vpack.c.bf16 %v475, %v474
      %v479 = vpack.c.bf16 %v476, %v476
      %v480 = vmul.f32 %v311, 0.25
      %v481 = vmul.f32 %v312, 0.25
      %v482 = vmul.f32 %v313, 0.25
      %v483 = vmul.f32 %v314, 0.25
      %v484 = vmul.f32 %v315, 0.25
      %486 = vset.pattern.permute.xlu0 0
      %487 = vperm.xlu0 %486, %v480
      %v488 = vpop.permute.xlu0 %487
      %491 = vset.pattern.permute.xlu0 0
      %492 = vperm.xlu0 %491, %v481
      %v493 = vpop.permute.xlu0 %492
      %496 = vset.pattern.permute.xlu0 0
      %497 = vperm.xlu0 %496, %v482
      %v498 = vpop.permute.xlu0 %497
      %501 = vset.pattern.permute.xlu0 0
      %502 = vperm.xlu0 %501, %v483
      %v503 = vpop.permute.xlu0 %502
      %506 = vset.pattern.permute.xlu0 0
      %507 = vperm.xlu0 %506, %v484
      %v508 = vpop.permute.xlu0 %507
      %v510 = vsub.f32 %v444, %v488
      %v511 = vsub.f32 %v449, %v493
      %v512 = vsub.f32 %v454, %v498
      %v513 = vsub.f32 %v459, %v503
      %v514 = vsub.f32 %v464, %v508
      %v515 = vmul.f32 %v510, 0.1
      %v516 = vmul.f32 %v511, 0.1
      %v517 = vmul.f32 %v512, 0.1
      %v518 = vmul.f32 %v513, 0.1
      %v519 = vmul.f32 %v514, 0.1
      %v520 = vmax.f32 %v510, %v515
      %v521 = vmax.f32 %v511, %v516
      %v522 = vmax.f32 %v512, %v517
      %v523 = vmax.f32 %v513, %v518
      %v524 = vmax.f32 %v514, %v519
      %v525 = vpack.c.bf16 %v521, %v520
      %v526 = vpack.c.bf16 %v523, %v522
      %v527 = vpack.c.bf16 %v524, %v524
      %v528 = vmul.f32 %v311, 0.5
      %v529 = vmul.f32 %v312, 0.5
      %v530 = vmul.f32 %v313, 0.5
      %v531 = vmul.f32 %v314, 0.5
      %v532 = vmul.f32 %v315, 0.5
      %534 = vset.pattern.permute.xlu0 0
      %535 = vperm.xlu0 %534, %v528
      %v536 = vpop.permute.xlu0 %535
      %539 = vset.pattern.permute.xlu0 0
      %540 = vperm.xlu0 %539, %v529
      %v541 = vpop.permute.xlu0 %540
      %544 = vset.pattern.permute.xlu0 0
      %545 = vperm.xlu0 %544, %v530
      %v546 = vpop.permute.xlu0 %545
      %549 = vset.pattern.permute.xlu0 0
      %550 = vperm.xlu0 %549, %v531
      %v551 = vpop.permute.xlu0 %550
      %554 = vset.pattern.permute.xlu0 0
      %555 = vperm.xlu0 %554, %v532
      %v556 = vpop.permute.xlu0 %555
      %v558 = vsub.f32 %v444, %v536
      %v559 = vsub.f32 %v449, %v541
      %v560 = vsub.f32 %v454, %v546
      %v561 = vsub.f32 %v459, %v551
      %v562 = vsub.f32 %v464, %v556
      %v563 = vmul.f32 %v558, 0.1
      %v564 = vmul.f32 %v559, 0.1
      %v565 = vmul.f32 %v560, 0.1
      %v566 = vmul.f32 %v561, 0.1
      %v567 = vmul.f32 %v562, 0.1
      %v568 = vmax.f32 %v558, %v563
      %v569 = vmax.f32 %v559, %v564
      %v570 = vmax.f32 %v560, %v565
      %v571 = vmax.f32 %v561, %v566
      %v572 = vmax.f32 %v562, %v567
      %v573 = vpack.c.bf16 %v569, %v568
      %v574 = vpack.c.bf16 %v571, %v570
      %v575 = vpack.c.bf16 %v572, %v572
      %v576 = vmul.f32 %v311, 0.75
      %v577 = vmul.f32 %v312, 0.75
      %v578 = vmul.f32 %v313, 0.75
      %v579 = vmul.f32 %v314, 0.75
      %v580 = vmul.f32 %v315, 0.75
      %582 = vset.pattern.permute.xlu0 0
      %583 = vperm.xlu0 %582, %v576
      %v584 = vpop.permute.xlu0 %583
      %587 = vset.pattern.permute.xlu0 0
      %588 = vperm.xlu0 %587, %v577
      %v589 = vpop.permute.xlu0 %588
      %592 = vset.pattern.permute.xlu0 0
      %593 = vperm.xlu0 %592, %v578
      %v594 = vpop.permute.xlu0 %593
      %597 = vset.pattern.permute.xlu0 0
      %598 = vperm.xlu0 %597, %v579
      %v599 = vpop.permute.xlu0 %598
      %602 = vset.pattern.permute.xlu0 0
      %603 = vperm.xlu0 %602, %v580
      %v604 = vpop.permute.xlu0 %603
      %v606 = vsub.f32 %v444, %v584
      %v607 = vsub.f32 %v449, %v589
      %v608 = vsub.f32 %v454, %v594
      %v609 = vsub.f32 %v459, %v599
      %v610 = vsub.f32 %v464, %v604
      %v611 = vmul.f32 %v606, 0.1
      %v612 = vmul.f32 %v607, 0.1
      %v613 = vmul.f32 %v608, 0.1
      %v614 = vmul.f32 %v609, 0.1
      %v615 = vmul.f32 %v610, 0.1
      %v616 = vmax.f32 %v606, %v611
      %v617 = vmax.f32 %v607, %v612
      %v618 = vmax.f32 %v608, %v613
      %v619 = vmax.f32 %v609, %v614
      %v620 = vmax.f32 %v610, %v615
      %v621 = vpack.c.bf16 %v617, %v616
      %v622 = vpack.c.bf16 %v619, %v618
      %v623 = vpack.c.bf16 %v620, %v620
      %624 = vset.pattern.permute.xlu0 0
      %625 = vperm.xlu0 %624, %v311
      %v626 = vpop.permute.xlu0 %625
      %628 = vset.pattern.permute.xlu0 0
      %629 = vperm.xlu0 %628, %v312
      %v630 = vpop.permute.xlu0 %629
      %632 = vset.pattern.permute.xlu0 0
      %633 = vperm.xlu0 %632, %v313
      %v634 = vpop.permute.xlu0 %633
      %636 = vset.pattern.permute.xlu0 0
      %637 = vperm.xlu0 %636, %v314
      %v638 = vpop.permute.xlu0 %637
      %640 = vset.pattern.permute.xlu0 0
      %641 = vperm.xlu0 %640, %v315
      %v642 = vpop.permute.xlu0 %641
      %v644 = vsub.f32 %v444, %v626
      %v645 = vsub.f32 %v449, %v630
      %v646 = vsub.f32 %v454, %v634
      %v647 = vsub.f32 %v459, %v638
      %v648 = vsub.f32 %v464, %v642
      %v649 = vmul.f32 %v644, 0.1
      %v650 = vmul.f32 %v645, 0.1
      %v651 = vmul.f32 %v646, 0.1
      %v652 = vmul.f32 %v647, 0.1
      %v653 = vmul.f32 %v648, 0.1
      %v654 = vmax.f32 %v644, %v649
      %v655 = vmax.f32 %v645, %v650
      %v656 = vmax.f32 %v646, %v651
      %v657 = vmax.f32 %v647, %v652
      %v658 = vmax.f32 %v648, %v653
      %v659 = vpack.c.bf16 %v655, %v654
      %v660 = vpack.c.bf16 %v657, %v656
      %v661 = vpack.c.bf16 %v658, %v658
      %v662 = vld [vmem:[%s3] sm:$0xf]
      %v663 = vld [vmem:[%s3 + $0x4] sm:$0xf]
      %v664 = vld [vmem:[%s3 + $0x8] sm:$0xf]
      %v665 = vld [vmem:[%s3 + $0xc] sm:$0xf]
      %v666 = vld [vmem:[%s3 + $0x10] sm:$0xf]
      %668 = vset.pattern.permute.xlu0 0
      %669 = vperm.xlu0 %668, %v321
      %v670 = vpop.permute.xlu0 %669
      %673 = vset.pattern.permute.xlu0 0
      %674 = vperm.xlu0 %673, %v322
      %v675 = vpop.permute.xlu0 %674
      %678 = vset.pattern.permute.xlu0 0
      %679 = vperm.xlu0 %678, %v323
      %v680 = vpop.permute.xlu0 %679
      %683 = vset.pattern.permute.xlu0 0
      %684 = vperm.xlu0 %683, %v324
      %v685 = vpop.permute.xlu0 %684
      %688 = vset.pattern.permute.xlu0 0
      %689 = vperm.xlu0 %688, %v325
      %v690 = vpop.permute.xlu0 %689
      %v697 = vunpack.c.l.b16 %v662
      %v698 = vunpack.c.l.b16 %v663
      %v699 = vunpack.c.l.b16 %v664
      %v700 = vunpack.c.l.b16 %v665
      %v701 = vunpack.c.l.b16 %v666
      %v702 = vpack.c.b16 %v698, %v697
      %v703 = vpack.c.b16 %v700, %v699
      %v704 = vpack.c.b16 %v701, %v701
      %vm705 = vcmask 326656
      %v707 = vsel %vm705, %v702, 0
      %v710 = vsel %vm705, %v703, 0
      %v713 = vsel %vm705, %v704, 0
      %v716 = vsel %vm373, %v479, 0
      %v719 = vsel %vm373, %v527, 0
      %v722 = vsel %vm373, %v575, 0
      %v725 = vsel %vm373, %v623, 0
      %v728 = vsel %vm373, %v661, 0
      %730 = vmatprep.subr.bf16.mxu0 %v525
      %731 = vmatpush1.bf16.msra.mxu0 %v477
      %732 = vmatprep.subr.bf16.mxu0 %v526
      %733 = vmatpush1.bf16.msra.mxu0 %v478
      %734 = vmatprep.subr.bf16.mxu0 %v719
      %735 = vmatpush1.bf16.msra.mxu0 %v716
      %736 = vmatprep.subr.bf16.mxu0 0
      %737 = vmatpush1.bf16.msra.mxu0 0
      %738 = vmatprep.subr.bf16.mxu0 0
      %739 = vmatpush1.bf16.msra.mxu0 0
      %740 = vmatprep.subr.bf16.mxu0 0
      %741 = vmatpush1.bf16.msra.mxu0 0
      %742 = vmatprep.subr.bf16.mxu0 0
      %743 = vmatpush1.bf16.msra.mxu0 0
      %744 = vmatprep.subr.bf16.mxu0 0
      %745 = vmatpush1.bf16.msra.mxu0 0
      %746 = vmatprep.subr.bf16.mxu0 0
      %747 = vmatpush1.bf16.msra.mxu0 0
      %748 = vmatprep.subr.bf16.mxu0 0
      %749 = vmatpush1.bf16.msra.mxu0 0
      %750 = vmatprep.subr.bf16.mxu0 0
      %751 = vmatpush1.bf16.msra.mxu0 0
      %752 = vmatprep.subr.bf16.mxu0 0
      %753 = vmatpush1.bf16.msra.mxu0 0
      %754 = vmatprep.subr.bf16.mxu0 0
      %755 = vmatpush1.bf16.msra.mxu0 0
      %756 = vmatprep.subr.bf16.mxu0 0
      %757 = vmatpush1.bf16.msra.mxu0 0
      %758 = vmatprep.subr.bf16.mxu0 0
      %759 = vmatpush1.bf16.msra.mxu0 0
      %760 = vmatprep.subr.bf16.mxu0 0
      %761 = vmatpush1.bf16.msra.mxu0 0
      %762 = vmatprep.mubr.bf16.mxu0 0
      %763 = vmatmul.mubr.bf16.gmra.mrb[0].mxu0 %v707
      %v764 = vpop.f32.mrb[0].mxu0
      %v765 = vadd.f32 %v670, %v764
      %v766 = vpop.f32.mrb[0].mxu0
      %v767 = vadd.f32 %v670, %v766
      %v768 = vpop.f32.mrb[0].mxu0
      %v769 = vadd.f32 %v675, %v768
      %v770 = vpop.f32.mrb[0].mxu0
      %v771 = vadd.f32 %v675, %v770
      %772 = vmatprep.mubr.bf16.mxu0 0
      %773 = vmatmul.mubr.bf16.gmra.mrb[0].mxu0 %v710
      %v774 = vpop.f32.mrb[0].mxu0
      %v775 = vadd.f32 %v680, %v774
      %v776 = vpop.f32.mrb[0].mxu0
      %v777 = vadd.f32 %v680, %v776
      %v778 = vpop.f32.mrb[0].mxu0
      %v779 = vadd.f32 %v685, %v778
      %v780 = vpop.f32.mrb[0].mxu0
      %v781 = vadd.f32 %v685, %v780
      %782 = vmatprep.mubr.bf16.mxu0 0
      %783 = vmatmul.mubr.bf16.gmra.mrb[0].mxu0 %v713
      %v784 = vpop.f32.mrb[0].mxu0
      %v785 = vadd.f32 %v690, %v784
      %v786 = vpop.f32.mrb[0].mxu0
      %v787 = vadd.f32 %v690, %v786
      %v788 = vpop.f32.mrb[0].mxu0
      %v789 = vpop.f32.mrb[0].mxu0
      %790 = vdwg.mxu0
      %791 = vmatprep.subr.bf16.mxu0 %v621
      %792 = vmatpush1.bf16.msra.mxu0 %v573
      %793 = vmatprep.subr.bf16.mxu0 %v622
      %794 = vmatpush1.bf16.msra.mxu0 %v574
      %795 = vmatprep.subr.bf16.mxu0 %v725
      %796 = vmatpush1.bf16.msra.mxu0 %v722
      %797 = vmatprep.subr.bf16.mxu0 0
      %798 = vmatpush1.bf16.msra.mxu0 0
      %799 = vmatprep.subr.bf16.mxu0 0
      %800 = vmatpush1.bf16.msra.mxu0 0
      %801 = vmatprep.subr.bf16.mxu0 0
      %802 = vmatpush1.bf16.msra.mxu0 0
      %803 = vmatprep.subr.bf16.mxu0 0
      %804 = vmatpush1.bf16.msra.mxu0 0
      %805 = vmatprep.subr.bf16.mxu0 0
      %806 = vmatpush1.bf16.msra.mxu0 0
      %807 = vmatprep.subr.bf16.mxu0 0
      %808 = vmatpush1.bf16.msra.mxu0 0
      %809 = vmatprep.subr.bf16.mxu0 0
      %810 = vmatpush1.bf16.msra.mxu0 0
      %811 = vmatprep.subr.bf16.mxu0 0
      %812 = vmatpush1.bf16.msra.mxu0 0
      %813 = vmatprep.subr.bf16.mxu0 0
      %814 = vmatpush1.bf16.msra.mxu0 0
      %815 = vmatprep.subr.bf16.mxu0 0
      %816 = vmatpush1.bf16.msra.mxu0 0
      %817 = vmatprep.subr.bf16.mxu0 0
      %818 = vmatpush1.bf16.msra.mxu0 0
      %819 = vmatprep.subr.bf16.mxu0 0
      %820 = vmatpush1.bf16.msra.mxu0 0
      %821 = vmatprep.subr.bf16.mxu0 0
      %822 = vmatpush1.bf16.msra.mxu0 0
      %823 = vmatprep.mubr.bf16.mxu0 0
      %824 = vmatmul.mubr.bf16.gmra.mrb[0].mxu0 %v707
      %v825 = vpop.f32.mrb[0].mxu0
      %v826 = vadd.f32 %v670, %v825
      %v827 = vpop.f32.mrb[0].mxu0
      %v828 = vadd.f32 %v670, %v827
      %v829 = vpop.f32.mrb[0].mxu0
      %v830 = vadd.f32 %v675, %v829
      %v831 = vpop.f32.mrb[0].mxu0
      %v832 = vadd.f32 %v675, %v831
      %833 = vmatprep.mubr.bf16.mxu0 0
      %834 = vmatmul.mubr.bf16.gmra.mrb[0].mxu0 %v710
      %v835 = vpop.f32.mrb[0].mxu0
      %v836 = vadd.f32 %v680, %v835
      %v837 = vpop.f32.mrb[0].mxu0
      %v838 = vadd.f32 %v680, %v837
      %v839 = vpop.f32.mrb[0].mxu0
      %v840 = vadd.f32 %v685, %v839
      %v841 = vpop.f32.mrb[0].mxu0
      %v842 = vadd.f32 %v685, %v841
      %843 = vmatprep.mubr.bf16.mxu0 0
      %844 = vmatmul.mubr.bf16.gmra.mrb[0].mxu0 %v713
      %v845 = vpop.f32.mrb[0].mxu0
      %v846 = vadd.f32 %v690, %v845
      %v847 = vpop.f32.mrb[0].mxu0
      %v848 = vadd.f32 %v690, %v847
      %v849 = vpop.f32.mrb[0].mxu0
      %v850 = vpop.f32.mrb[0].mxu0
      %851 = vdwg.mxu0
      %852 = vmatprep.subr.bf16.mxu0 0
      %853 = vmatpush1.bf16.msra.mxu0 %v659
      %854 = vmatprep.subr.bf16.mxu0 0
      %855 = vmatpush1.bf16.msra.mxu0 %v660
      %856 = vmatprep.subr.bf16.mxu0 0
      %857 = vmatpush1.bf16.msra.mxu0 %v728
      %858 = vmatprep.subr.bf16.mxu0 0
      %859 = vmatpush1.bf16.msra.mxu0 0
      %860 = vmatprep.subr.bf16.mxu0 0
      %861 = vmatpush1.bf16.msra.mxu0 0
      %862 = vmatprep.subr.bf16.mxu0 0
      %863 = vmatpush1.bf16.msra.mxu0 0
      %864 = vmatprep.subr.bf16.mxu0 0
      %865 = vmatpush1.bf16.msra.mxu0 0
      %866 = vmatprep.subr.bf16.mxu0 0
      %867 = vmatpush1.bf16.msra.mxu0 0
      %868 = vmatprep.subr.bf16.mxu0 0
      %869 = vmatpush1.bf16.msra.mxu0 0
      %870 = vmatprep.subr.bf16.mxu0 0
      %871 = vmatpush1.bf16.msra.mxu0 0
      %872 = vmatprep.subr.bf16.mxu0 0
      %873 = vmatpush1.bf16.msra.mxu0 0
      %874 = vmatprep.subr.bf16.mxu0 0
      %875 = vmatpush1.bf16.msra.mxu0 0
      %876 = vmatprep.subr.bf16.mxu0 0
      %877 = vmatpush1.bf16.msra.mxu0 0
      %878 = vmatprep.subr.bf16.mxu0 0
      %879 = vmatpush1.bf16.msra.mxu0 0
      %880 = vmatprep.subr.bf16.mxu0 0
      %881 = vmatpush1.bf16.msra.mxu0 0
      %882 = vmatprep.subr.bf16.mxu0 0
      %883 = vmatpush1.bf16.msra.mxu0 0
      %884 = vmatprep.mubr.bf16.mxu0 0
      %885 = vmatmul.mubr.bf16.gmra.mrb[0].mxu0 %v707
      %v886 = vpop.f32.mrb[0].mxu0
      %v887 = vadd.f32 %v670, %v886
      %v888 = vpop.f32.mrb[0].mxu0
      %v889 = vpop.f32.mrb[0].mxu0
      %v890 = vadd.f32 %v675, %v889
      %v891 = vpop.f32.mrb[0].mxu0
      %892 = vmatprep.mubr.bf16.mxu0 0
      %893 = vmatmul.mubr.bf16.gmra.mrb[0].mxu0 %v710
      %v894 = vpop.f32.mrb[0].mxu0
      %v895 = vadd.f32 %v680, %v894
      %v896 = vpop.f32.mrb[0].mxu0
      %v897 = vpop.f32.mrb[0].mxu0
      %v898 = vadd.f32 %v685, %v897
      %v899 = vpop.f32.mrb[0].mxu0
      %900 = vmatprep.mubr.bf16.mxu0 0
      %901 = vmatmul.mubr.bf16.gmra.mrb[0].mxu0 %v713
      %v902 = vpop.f32.mrb[0].mxu0
      %v903 = vadd.f32 %v690, %v902
      %v904 = vpop.f32.mrb[0].mxu0
      %v905 = vpop.f32.mrb[0].mxu0
      %v906 = vpop.f32.mrb[0].mxu0
      %907 = vdwg.mxu0
      %v908 = vmul.f32 %v765, 0.1
      %v909 = vmul.f32 %v767, 0.1
      %v910 = vmul.f32 %v826, 0.1
      %v911 = vmul.f32 %v828, 0.1
      %v912 = vmul.f32 %v887, 0.1
      %v913 = vmul.f32 %v769, 0.1
      %v914 = vmul.f32 %v771, 0.1
      %v915 = vmul.f32 %v830, 0.1
      %v916 = vmul.f32 %v832, 0.1
      %v917 = vmul.f32 %v890, 0.1
      %v918 = vmul.f32 %v775, 0.1
      %v919 = vmul.f32 %v777, 0.1
      %v920 = vmul.f32 %v836, 0.1
      %v921 = vmul.f32 %v838, 0.1
      %v922 = vmul.f32 %v895, 0.1
      %v923 = vmul.f32 %v779, 0.1
      %v924 = vmul.f32 %v781, 0.1
      %v925 = vmul.f32 %v840, 0.1
      %v926 = vmul.f32 %v842, 0.1
      %v927 = vmul.f32 %v898, 0.1
      %v928 = vmul.f32 %v785, 0.1
      %v929 = vmul.f32 %v787, 0.1
      %v930 = vmul.f32 %v846, 0.1
      %v931 = vmul.f32 %v848, 0.1
      %v932 = vmul.f32 %v903, 0.1
      %v933 = vmax.f32 %v765, %v908
      %v934 = vmax.f32 %v767, %v909
      %v935 = vmax.f32 %v826, %v910
      %v936 = vmax.f32 %v828, %v911
      %v937 = vmax.f32 %v887, %v912
      %v938 = vmax.f32 %v769, %v913
      %v939 = vmax.f32 %v771, %v914
      %v940 = vmax.f32 %v830, %v915
      %v941 = vmax.f32 %v832, %v916
      %v942 = vmax.f32 %v890, %v917
      %v943 = vmax.f32 %v775, %v918
      %v944 = vmax.f32 %v777, %v919
      %v945 = vmax.f32 %v836, %v920
      %v946 = vmax.f32 %v838, %v921
      %v947 = vmax.f32 %v895, %v922
      %v948 = vmax.f32 %v779, %v923
      %v949 = vmax.f32 %v781, %v924
      %v950 = vmax.f32 %v840, %v925
      %v951 = vmax.f32 %v842, %v926
      %v952 = vmax.f32 %v898, %v927
      %v953 = vmax.f32 %v785, %v928
      %v954 = vmax.f32 %v787, %v929
      %v955 = vmax.f32 %v846, %v930
      %v956 = vmax.f32 %v848, %v931
      %v957 = vmax.f32 %v903, %v932
      %959 = vset.pattern.permute.xlu0 0
      %960 = vperm.xlu0 %959, %v326
      %v961 = vpop.permute.xlu0 %960
      %964 = vset.pattern.permute.xlu0 0
      %965 = vperm.xlu0 %964, %v327
      %v966 = vpop.permute.xlu0 %965
      %969 = vset.pattern.permute.xlu0 0
      %970 = vperm.xlu0 %969, %v328
      %v971 = vpop.permute.xlu0 %970
      %974 = vset.pattern.permute.xlu0 0
      %975 = vperm.xlu0 %974, %v329
      %v976 = vpop.permute.xlu0 %975
      %979 = vset.pattern.permute.xlu0 0
      %980 = vperm.xlu0 %979, %v330
      %v981 = vpop.permute.xlu0 %980
      %v983 = vmul.f32 %v933, %v961
      %v984 = vmul.f32 %v938, %v966
      %v985 = vmul.f32 %v943, %v971
      %v986 = vmul.f32 %v948, %v976
      %v987 = vmul.f32 %v953, %v981
      %v988 = vadd.f32 %v983, %v984
      %v989 = vadd.f32 %v988, %v985
      %v990 = vadd.f32 %v989, %v986
      %v991 = vadd.f32 %v990, %v987
      %v992 = vrot.slane %v991, 4
      %v993 = vadd.f32 %v991, %v992
      %v994 = vrot.slane %v993, 2
      %v995 = vadd.f32 %v993, %v994
      %v996 = vrot.slane %v995, 1
      %v997 = vadd.f32 %v995, %v996
      %v998 = vstv %s331
      %v999 = vadd.f32 %v997, %v998
      %v1000 = vmul.f32 %v310, %v999
      %v1001 = vmul.f32 %v934, %v961
      %v1002 = vmul.f32 %v939, %v966
      %v1003 = vmul.f32 %v944, %v971
      %v1004 = vmul.f32 %v949, %v976
      %v1005 = vmul.f32 %v954, %v981
      %v1006 = vadd.f32 %v1001, %v1002
      %v1007 = vadd.f32 %v1006, %v1003
      %v1008 = vadd.f32 %v1007, %v1004
      %v1009 = vadd.f32 %v1008, %v1005
      %v1010 = vrot.slane %v1009, 4
      %v1011 = vadd.f32 %v1009, %v1010
      %v1012 = vrot.slane %v1011, 2
      %v1013 = vadd.f32 %v1011, %v1012
      %v1014 = vrot.slane %v1013, 1
      %v1015 = vadd.f32 %v1013, %v1014
      %v1016 = vadd.f32 %v1015, %v998
      %v1017 = vmul.f32 %v310, %v1016
      %v1018 = vmul.f32 %v935, %v961
      %v1019 = vmul.f32 %v940, %v966
      %v1020 = vmul.f32 %v945, %v971
      %v1021 = vmul.f32 %v950, %v976
      %v1022 = vmul.f32 %v955, %v981
      %v1023 = vadd.f32 %v1018, %v1019
      %v1024 = vadd.f32 %v1023, %v1020
      %v1025 = vadd.f32 %v1024, %v1021
      %v1026 = vadd.f32 %v1025, %v1022
      %v1027 = vrot.slane %v1026, 4
      %v1028 = vadd.f32 %v1026, %v1027
      %v1029 = vrot.slane %v1028, 2
      %v1030 = vadd.f32 %v1028, %v1029
      %v1031 = vrot.slane %v1030, 1
      %v1032 = vadd.f32 %v1030, %v1031
      %v1033 = vadd.f32 %v1032, %v998
      %v1034 = vmul.f32 %v310, %v1033
      %v1035 = vmul.f32 %v936, %v961
      %v1036 = vmul.f32 %v941, %v966
      %v1037 = vmul.f32 %v946, %v971
      %v1038 = vmul.f32 %v951, %v976
      %v1039 = vmul.f32 %v956, %v981
      %v1040 = vadd.f32 %v1035, %v1036
      %v1041 = vadd.f32 %v1040, %v1037
      %v1042 = vadd.f32 %v1041, %v1038
      %v1043 = vadd.f32 %v1042, %v1039
      %v1044 = vrot.slane %v1043, 4
      %v1045 = vadd.f32 %v1043, %v1044
      %v1046 = vrot.slane %v1045, 2
      %v1047 = vadd.f32 %v1045, %v1046
      %v1048 = vrot.slane %v1047, 1
      %v1049 = vadd.f32 %v1047, %v1048
      %v1050 = vadd.f32 %v1049, %v998
      %v1051 = vmul.f32 %v310, %v1050
      %v1052 = vmul.f32 %v937, %v961
      %v1053 = vmul.f32 %v942, %v966
      %v1054 = vmul.f32 %v947, %v971
      %v1055 = vmul.f32 %v952, %v976
      %v1056 = vmul.f32 %v957, %v981
      %v1057 = vadd.f32 %v1052, %v1053
      %v1058 = vadd.f32 %v1057, %v1054
      %v1059 = vadd.f32 %v1058, %v1055
      %v1060 = vadd.f32 %v1059, %v1056
      %v1061 = vrot.slane %v1060, 4
      %v1062 = vadd.f32 %v1060, %v1061
      %v1063 = vrot.slane %v1062, 2
      %v1064 = vadd.f32 %v1062, %v1063
      %v1065 = vrot.slane %v1064, 1
      %v1066 = vadd.f32 %v1064, %v1065
      %v1067 = vadd.f32 %v1066, %v998
      %v1068 = vmul.f32 %v310, %v1067
      %v1070 = vrot.slane %v1017, 7
      %v1073 = vrot.slane %v1034, 6
      %v1076 = vrot.slane %v1051, 5
      %v1079 = vrot.slane %v1068, 4
      %vm1081 = vcmask 1040384
      %v1082 = vsel %vm1081, %v1000, %v1070
      %vm1083 = vcmask 1041408
      %v1084 = vsel %vm1083, %v1082, %v1073
      %vm1085 = vcmask 1042432
      %v1086 = vsel %vm1085, %v1084, %v1076
      %v1087 = vsel %vm373, %v1086, %v1079
      %v1088 = vlaneseq
      %v1089 = vshrl.u32 %v1088, 7
      %v1090 = vadd.s32 %v1089, 8
      %v1091 = vadd.s32 %v1089, 16
      %v1092 = vadd.s32 %v1089, 24
      %v1093 = vadd.s32 %v1089, 32
      %v1094 = vadd.s32 %v1089, 40
      %v1095 = vadd.s32 %v1089, 48
      %v1096 = vadd.s32 %v1089, 56
      %v1097 = vadd.s32 %v1089, 64
      %v1098 = vadd.s32 %v1089, 72
      %v1099 = vadd.s32 %v1089, 80
      %v1100 = vadd.s32 %v1089, 88
      %v1101 = vadd.s32 %v1089, 96
      %v1102 = vadd.s32 %v1089, 104
      %v1103 = vadd.s32 %v1089, 112
      %v1104 = vadd.s32 %v1089, 120
      %v1105 = vadd.s32 %v1089, 128
      %v1106 = vadd.s32 %v1089, 136
      %v1107 = vadd.s32 %v1089, 144
      %v1108 = vadd.s32 %v1089, 152
      %v1109 = vadd.s32 %v1089, 160
      %v1110 = vadd.s32 %v1089, 168
      %v1111 = vadd.s32 %v1089, 176
      %v1112 = vadd.s32 %v1089, 184
      %v1113 = vadd.s32 %v1089, 192
      %v1114 = vadd.s32 %v1089, 200
      %v1115 = vadd.s32 %v1089, 208
      %v1116 = vadd.s32 %v1089, 216
      %v1117 = vadd.s32 %v1089, 224
      %v1118 = vadd.s32 %v1089, 232
      %v1119 = vadd.s32 %v1089, 240
      %v1120 = vadd.s32 %v1089, 248
      %v1121 = vcvt.f32.s32.to.zero.pseudo %v310
      %v1122 = vlaneseq
      %v1123 = vshrl.u32 %v1122, 7
      %v1124 = vsub.s32 4, %v1123
      %v1125 = vrot.slane %v1121, %v1124
      %vm1126 = vcmp.eq.s32.totalorder %v1089, %v1125
      %vm1127 = vcmp.eq.s32.totalorder %v1090, %v1125
      %vm1128 = vcmp.eq.s32.totalorder %v1091, %v1125
      %vm1129 = vcmp.eq.s32.totalorder %v1092, %v1125
      %vm1130 = vcmp.eq.s32.totalorder %v1093, %v1125
      %vm1131 = vcmp.eq.s32.totalorder %v1094, %v1125
      %vm1132 = vcmp.eq.s32.totalorder %v1095, %v1125
      %vm1133 = vcmp.eq.s32.totalorder %v1096, %v1125
      %vm1134 = vcmp.eq.s32.totalorder %v1097, %v1125
      %vm1135 = vcmp.eq.s32.totalorder %v1098, %v1125
      %vm1136 = vcmp.eq.s32.totalorder %v1099, %v1125
      %vm1137 = vcmp.eq.s32.totalorder %v1100, %v1125
      %vm1138 = vcmp.eq.s32.totalorder %v1101, %v1125
      %vm1139 = vcmp.eq.s32.totalorder %v1102, %v1125
      %vm1140 = vcmp.eq.s32.totalorder %v1103, %v1125
      %vm1141 = vcmp.eq.s32.totalorder %v1104, %v1125
      %vm1142 = vcmp.eq.s32.totalorder %v1105, %v1125
      %vm1143 = vcmp.eq.s32.totalorder %v1106, %v1125
      %vm1144 = vcmp.eq.s32.totalorder %v1107, %v1125
      %vm1145 = vcmp.eq.s32.totalorder %v1108, %v1125
      %vm1146 = vcmp.eq.s32.totalorder %v1109, %v1125
      %vm1147 = vcmp.eq.s32.totalorder %v1110, %v1125
      %vm1148 = vcmp.eq.s32.totalorder %v1111, %v1125
      %vm1149 = vcmp.eq.s32.totalorder %v1112, %v1125
      %vm1150 = vcmp.eq.s32.totalorder %v1113, %v1125
      %vm1151 = vcmp.eq.s32.totalorder %v1114, %v1125
      %vm1152 = vcmp.eq.s32.totalorder %v1115, %v1125
      %vm1153 = vcmp.eq.s32.totalorder %v1116, %v1125
      %vm1154 = vcmp.eq.s32.totalorder %v1117, %v1125
      %vm1155 = vcmp.eq.s32.totalorder %v1118, %v1125
      %vm1156 = vcmp.eq.s32.totalorder %v1119, %v1125
      %vm1157 = vcmp.eq.s32.totalorder %v1120, %v1125
      %v1158 = vsel %vm1126, 1, 0
      %v1159 = vsel %vm1127, 1, 0
      %v1160 = vsel %vm1128, 1, 0
      %v1161 = vsel %vm1129, 1, 0
      %v1162 = vsel %vm1130, 1, 0
      %v1163 = vsel %vm1131, 1, 0
      %v1164 = vsel %vm1132, 1, 0
      %v1165 = vsel %vm1133, 1, 0
      %v1166 = vsel %vm1134, 1, 0
      %v1167 = vsel %vm1135, 1, 0
      %v1168 = vsel %vm1136, 1, 0
      %v1169 = vsel %vm1137, 1, 0
      %v1170 = vsel %vm1138, 1, 0
      %v1171 = vsel %vm1139, 1, 0
      %v1172 = vsel %vm1140, 1, 0
      %v1173 = vsel %vm1141, 1, 0
      %v1174 = vsel %vm1142, 1, 0
      %v1175 = vsel %vm1143, 1, 0
      %v1176 = vsel %vm1144, 1, 0
      %v1177 = vsel %vm1145, 1, 0
      %v1178 = vsel %vm1146, 1, 0
      %v1179 = vsel %vm1147, 1, 0
      %v1180 = vsel %vm1148, 1, 0
      %v1181 = vsel %vm1149, 1, 0
      %v1182 = vsel %vm1150, 1, 0
      %v1183 = vsel %vm1151, 1, 0
      %v1184 = vsel %vm1152, 1, 0
      %v1185 = vsel %vm1153, 1, 0
      %v1186 = vsel %vm1154, 1, 0
      %v1187 = vsel %vm1155, 1, 0
      %v1188 = vsel %vm1156, 1, 0
      %v1189 = vsel %vm1157, 1, 0
      %v1190 = vcvt.s32.f32 %v1158
      %v1191 = vcvt.s32.f32 %v1159
      %v1192 = vcvt.s32.f32 %v1160
      %v1193 = vcvt.s32.f32 %v1161
      %v1194 = vcvt.s32.f32 %v1162
      %v1195 = vcvt.s32.f32 %v1163
      %v1196 = vcvt.s32.f32 %v1164
      %v1197 = vcvt.s32.f32 %v1165
      %v1198 = vcvt.s32.f32 %v1166
      %v1199 = vcvt.s32.f32 %v1167
      %v1200 = vcvt.s32.f32 %v1168
      %v1201 = vcvt.s32.f32 %v1169
      %v1202 = vcvt.s32.f32 %v1170
      %v1203 = vcvt.s32.f32 %v1171
      %v1204 = vcvt.s32.f32 %v1172
      %v1205 = vcvt.s32.f32 %v1173
      %v1206 = vcvt.s32.f32 %v1174
      %v1207 = vcvt.s32.f32 %v1175
      %v1208 = vcvt.s32.f32 %v1176
      %v1209 = vcvt.s32.f32 %v1177
      %v1210 = vcvt.s32.f32 %v1178
      %v1211 = vcvt.s32.f32 %v1179
      %v1212 = vcvt.s32.f32 %v1180
      %v1213 = vcvt.s32.f32 %v1181
      %v1214 = vcvt.s32.f32 %v1182
      %v1215 = vcvt.s32.f32 %v1183
      %v1216 = vcvt.s32.f32 %v1184
      %v1217 = vcvt.s32.f32 %v1185
      %v1218 = vcvt.s32.f32 %v1186
      %v1219 = vcvt.s32.f32 %v1187
      %v1220 = vcvt.s32.f32 %v1188
      %v1221 = vcvt.s32.f32 %v1189
      %v1222 = vld [vmem:[%s302] sm:$0x1f]
      %v1223 = vld [vmem:[%s302 + $0x8] sm:$0x1f]
      %1224 = vmatprep.subr.mxu0 0.0
      %1225 = vmatpush1.xpose.msra.mxu0 %v1190
      %1226 = vmatprep.subr.mxu0 0.0
      %1227 = vmatpush1.xpose.msra.mxu0 %v1191
      %1228 = vmatprep.subr.mxu0 0.0
      %1229 = vmatpush1.xpose.msra.mxu0 %v1192
      %1230 = vmatprep.subr.mxu0 0.0
      %1231 = vmatpush1.xpose.msra.mxu0 %v1193
      %1232 = vmatprep.subr.mxu0 0.0
      %1233 = vmatpush1.xpose.msra.mxu0 %v1194
      %1234 = vmatprep.subr.mxu0 0.0
      %1235 = vmatpush1.xpose.msra.mxu0 %v1195
      %1236 = vmatprep.subr.mxu0 0.0
      %1237 = vmatpush1.xpose.msra.mxu0 %v1196
      %1238 = vmatprep.subr.mxu0 0.0
      %1239 = vmatpush1.xpose.msra.mxu0 %v1197
      %1240 = vmatprep.subr.mxu0 0.0
      %1241 = vmatpush1.xpose.msra.mxu0 %v1198
      %1242 = vmatprep.subr.mxu0 0.0
      %1243 = vmatpush1.xpose.msra.mxu0 %v1199
      %1244 = vmatprep.subr.mxu0 0.0
      %1245 = vmatpush1.xpose.msra.mxu0 %v1200
      %1246 = vmatprep.subr.mxu0 0.0
      %1247 = vmatpush1.xpose.msra.mxu0 %v1201
      %1248 = vmatprep.subr.mxu0 0.0
      %1249 = vmatpush1.xpose.msra.mxu0 %v1202
      %1250 = vmatprep.subr.mxu0 0.0
      %1251 = vmatpush1.xpose.msra.mxu0 %v1203
      %1252 = vmatprep.subr.mxu0 0.0
      %1253 = vmatpush1.xpose.msra.mxu0 %v1204
      %1254 = vmatprep.subr.mxu0 0.0
      %1255 = vmatpush1.xpose.msra.mxu0 %v1205
      %1256 = vmatprep.subr.mxu0 0.0
      %1257 = vmatpush1.xpose.msra.mxu0 %v1206
      %1258 = vmatprep.subr.mxu0 0.0
      %1259 = vmatpush1.xpose.msra.mxu0 %v1207
      %1260 = vmatprep.subr.mxu0 0.0
      %1261 = vmatpush1.xpose.msra.mxu0 %v1208
      %1262 = vmatprep.subr.mxu0 0.0
      %1263 = vmatpush1.xpose.msra.mxu0 %v1209
      %1264 = vmatprep.subr.mxu0 0.0
      %1265 = vmatpush1.xpose.msra.mxu0 %v1210
      %1266 = vmatprep.subr.mxu0 0.0
      %1267 = vmatpush1.xpose.msra.mxu0 %v1211
      %1268 = vmatprep.subr.mxu0 0.0
      %1269 = vmatpush1.xpose.msra.mxu0 %v1212
      %1270 = vmatprep.subr.mxu0 0.0
      %1271 = vmatpush1.xpose.msra.mxu0 %v1213
      %1272 = vmatprep.subr.mxu0 0.0
      %1273 = vmatpush1.xpose.msra.mxu0 %v1214
      %1274 = vmatprep.subr.mxu0 0.0
      %1275 = vmatpush1.xpose.msra.mxu0 %v1215
      %1276 = vmatprep.subr.mxu0 0.0
      %1277 = vmatpush1.xpose.msra.mxu0 %v1216
      %1278 = vmatprep.subr.mxu0 0.0
      %1279 = vmatpush1.xpose.msra.mxu0 %v1217
      %1280 = vmatprep.subr.mxu0 0.0
      %1281 = vmatpush1.xpose.msra.mxu0 %v1218
      %1282 = vmatprep.subr.mxu0 0.0
      %1283 = vmatpush1.xpose.msra.mxu0 %v1219
      %1284 = vmatprep.subr.mxu0 0.0
      %1285 = vmatpush1.xpose.msra.mxu0 %v1220
      %1286 = vmatprep.subr.mxu0 0.0
      %1287 = vmatpush1.xpose.msra.mxu0 %v1221
      %1288 = vmatprep.mubr.f32.mxu0 0.0
      %1289 = vmatmul.mubr.f32.gmra.mrb[0].mxu0 %v1087
      %v1290 = vpop.f32.mrb[0].mxu0
      %v1291 = vadd.f32 0.0, %v1290
      %v1292 = vpop.f32.mrb[0].mxu0
      %v1293 = vadd.f32 0.0, %v1292
      %1294 = vdwg.mxu0
      %v1295 = vadd.f32 %v1222, %v1291
      %v1296 = vadd.f32 %v1223, %v1293
      %1297 = vst [vmem:[%s302] sm:$0x1f] %v1295
      %1298 = vst [vmem:[%s302 + $0x8] sm:$0x1f] %v1296
      %p1299 = scmp.lt.s32.totalorder %s23, 1
      %s1300 = scalar_select %p1299, %s23, 1
      %s1301 = smul.addr %s1300, 2
      %s1302 = smul.addr %s1301, 8
      %s1303 = scalar_lea.vmem %s7, %s1302
      // Predicated region
      $region53: #{tpu_custom_call.1} parent=47 // pred_check
        %p1304 = pneg %p205
      $region54: #{tpu_custom_call.1} parent=47 // pred_check_branch
        %1306 = sbr.rel (%p1304) target = $region56
      $region55: #{tpu_custom_call.1} parent=47 // pred_region
        _
      $region56: #{tpu_custom_call.1} parent=47 // pred_fallthru
        _
    $region48: #{tpu_custom_call.1} parent=5 // pred_fallthru
      _
    %p1307 = scmp.le.s32.totalorder 2, %s14
    // Predicated region
    $region57: #{tpu_custom_call.1} parent=5 // pred_check
      %p1308 = pneg %p1307
    $region58: #{tpu_custom_call.1} parent=5 // pred_check_branch
      %1310 = sbr.rel (%p1308) target = $region60
    $region59: #{tpu_custom_call.1} parent=5 // pred_region
      %s1311 = ssub.s32 %s14, 2
      // Predicated region
      $region61: #{tpu_custom_call.1} parent=59 // pred_check
        %p1312 = pneg %p211
      $region62: #{tpu_custom_call.1} parent=59 // pred_check_branch
        %1314 = sbr.rel (%p1312) target = $region64
      $region63: #{tpu_custom_call.1} parent=59 // pred_region
        %p1315 = scmp.lt.s32.totalorder %s25, 1
        %s1316 = scalar_select %p1315, %s25, 1
        %s1317 = smul.addr %s1316, 2
        %s1318 = smul.addr %s1317, 8
        %s1319 = scalar_lea.vmem %s7, %s1318
      $region64: #{tpu_custom_call.1} parent=59 // pred_fallthru
        _
    $region60: #{tpu_custom_call.1} parent=5 // pred_fallthru
      _
  $region6: #{tpu_custom_call.1} parent=0 // loop_footer
    %s18 = sadd.s32 1, %s14
  $region7: #{tpu_custom_call.1} parent=0 // loop_footer_branch
    %13 = sbr.rel target = $region3
  $region8: #{tpu_custom_call.1} parent=0 // loop_exit
    _

</llo_original>
